<compile_context>
chip_gen: v6e
topology: v6e:2x2x1
jax: 0.10.0
libtpu: 0.0.40
codegen_flags: <defaults>
</compile_context>

<pallas_src>
import jax
import jax.numpy as jnp
import numpy as np
from jax.experimental import pallas as pl
from jax.experimental.pallas import tpu as pltpu


def lstm_head_kernel(tok_ref, len_ref, embproj_ref, whh_ref,
                     w1_ref, b1_ref, w2_ref, b2_ref, out_ref):
    B = len_ref.shape[0]
    TB = tok_ref.shape[0]
    T = TB // B
    Vp = embproj_ref.shape[0]          # padded vocab (multiple of 8)
    H = whh_ref.shape[0]

    toks = tok_ref[...]                # (T*B, 1) int32, time-major (row = t*B + b)
    lengths = len_ref[...]             # (B, 1)   int32
    whh = whh_ref[...]                 # (H, 4H)  pre-scaled per gate (0.5 on i/f/o)
    emb_proj = embproj_ref[...]        # (Vp, 4H) = (embedding @ W_ih + b) * gate_scale

    # Hoisted input projection for ALL timesteps: one-hot(token) @ emb_proj.
    # One MXU pass (TB x Vp) x (Vp x 4H); removes x@W_ih from the serial loop.
    onehot = (jax.lax.broadcasted_iota(jnp.int32, (TB, Vp), 1) == toks)
    gx = jnp.dot(onehot.astype(jnp.float32), emb_proj,
                 preferred_element_type=jnp.float32)        # (T*B, 4H)

    # Hoisted per-lane activation affine: for the g-gate block we want tanh(x),
    # for i/f/o we want sigmoid(x) = 0.5*tanh(x/2) + 0.5 (the /2 is already
    # folded into emb_proj / whh), so:  act = tanh(pre) * post_scale + post_bias.
    lane = jax.lax.broadcasted_iota(jnp.int32, (B, 4 * H), 1)
    g_lanes = (lane >= 2 * H) & (lane < 3 * H)
    post_scale = jnp.where(g_lanes, 1.0, 0.5).astype(jnp.float32)   # (B, 4H)
    post_bias = jnp.where(g_lanes, 0.0, 0.5).astype(jnp.float32)    # (B, 4H)

    # Hoisted packed-sequence freeze masks (all compares before the recurrence).
    upd_masks = [lengths > t for t in range(T)]             # list of (B, 1) bool

    h = jnp.zeros((B, H), jnp.float32)
    c = jnp.zeros((B, H), jnp.float32)

    # Static unroll over the fixed, small T; only h @ W_hh and one full-vreg tanh
    # (plus the cell tanh) sit on the serial path.
    for t in range(T):
        pre = gx[t * B:(t + 1) * B, :] \
            + jnp.dot(h, whh, preferred_element_type=jnp.float32)   # (B, 4H)
        th = jnp.tanh(pre)                                           # single EUP pass
        act = th * post_scale + post_bias                            # sigmoid/tanh per lane
        i_g = act[:, 0 * H:1 * H]
        f_g = act[:, 1 * H:2 * H]
        g_g = act[:, 2 * H:3 * H]
        o_g = act[:, 3 * H:4 * H]
        c_new = f_g * c + i_g * g_g
        h_new = o_g * jnp.tanh(c_new)
        # packed-sequence semantics: only advance state while t < length[b]
        upd = upd_masks[t]
        h = jnp.where(upd, h_new, h)
        c = jnp.where(upd, c_new, c)

    # FC head: fc1 -> relu -> fc2 -> sigmoid.
    z1 = jnp.dot(h, w1_ref[...], preferred_element_type=jnp.float32) + b1_ref[...]
    z1 = jnp.maximum(z1, 0.0)
    # fc2 as VPU mul + lane reduction instead of an N=1 MXU pass.
    z2 = jnp.sum(z1 * w2_ref[...], axis=-1, keepdims=True) + b2_ref[...]
    out_ref[...] = jax.nn.sigmoid(z2)


def try_rnn_forward(tokens, lengths, params):
    """tokens: (B, T) int32, lengths: (B,) int32."""
    B, T = tokens.shape
    H = params["w_hh"].shape[0]

    # Per-gate pre-scale for the tanh-identity sigmoid: i, f, o gates get x/2,
    # the g gate stays at x (PyTorch gate order i, f, g, o). Exact (power of 2).
    gate_scale = jnp.concatenate([
        jnp.full((2 * H,), 0.5, jnp.float32),   # i, f
        jnp.ones((H,), jnp.float32),            # g
        jnp.full((H,), 0.5, jnp.float32),       # o
    ])

    # Fold embedding lookup + input projection + LSTM bias (+ gate pre-scale)
    # into one small table.
    emb_proj = (jnp.dot(params["embedding"], params["w_ih"],
                        precision=jax.lax.Precision.HIGHEST)
                + params["b_lstm"]) * gate_scale                      # (V, 4H)
    # Pad the vocab dim to a multiple of the 8-sublane tile (zero rows are never
    # selected by the one-hot since all token ids are < V).
    V = emb_proj.shape[0]
    V_pad = -(-V // 8) * 8
    if V_pad != V:
        emb_proj = jnp.pad(emb_proj, ((0, V_pad - V), (0, 0)))

    whh_scaled = params["w_hh"] * gate_scale                          # (H, 4H)
    w2_row = params["w_fc2"].reshape(1, -1)                           # (1, F)

    tok_tm = jnp.transpose(tokens).reshape(T * B, 1).astype(jnp.int32)  # time-major ids
    lengths2d = lengths.reshape(B, 1).astype(jnp.int32)

    out = pl.pallas_call(
        lstm_head_kernel,
        out_shape=jax.ShapeDtypeStruct((B, 1), jnp.float32),
        in_specs=[pl.BlockSpec(memory_space=pltpu.MemorySpace.VMEM)] * 8,
        out_specs=pl.BlockSpec(memory_space=pltpu.MemorySpace.VMEM),
    )(tok_tm, lengths2d, emb_proj, whh_scaled,
      params["w_fc1"], params["b_fc1"], w2_row, params["b_fc2"])
    return out


def reference_forward(tokens, lengths, params):
    """Pure-JAX reference mirroring the PyTorch module (true sigmoid/tanh)."""
    emb = jnp.take(params["embedding"], tokens, axis=0)  # (B, T, E)
    B, T, _ = emb.shape
    H = params["w_hh"].shape[0]
    h = jnp.zeros((B, H), jnp.float32)
    c = jnp.zeros((B, H), jnp.float32)
    for t in range(T):
        gates = emb[:, t, :] @ params["w_ih"] + h @ params["w_hh"] + params["b_lstm"]
        i_g = jax.nn.sigmoid(gates[:, 0 * H:1 * H])
        f_g = jax.nn.sigmoid(gates[:, 1 * H:2 * H])
        g_g = jnp.tanh(gates[:, 2 * H:3 * H])
        o_g = jax.nn.sigmoid(gates[:, 3 * H:4 * H])
        c_new = f_g * c + i_g * g_g
        h_new = o_g * jnp.tanh(c_new)
        mask = (t < lengths).reshape(B, 1)
        h = jnp.where(mask, h_new, h)
        c = jnp.where(mask, c_new, c)
    z1 = jnp.maximum(h @ params["w_fc1"] + params["b_fc1"], 0.0)
    return jax.nn.sigmoid(z1 @ params["w_fc2"] + params["b_fc2"])


def init_params(key, num_embeddings, embedding_dim, rnn_hidden_size, fc_hidden_size):
    ks = jax.random.split(key, 8)
    V, E, H, F = num_embeddings, embedding_dim, rnn_hidden_size, fc_hidden_size
    k_lstm = 1.0 / np.sqrt(H)
    k_fc1 = 1.0 / np.sqrt(H)
    k_fc2 = 1.0 / np.sqrt(F)

    emb = jax.random.normal(ks[0], (V, E), jnp.float32)
    emb = emb.at[0].set(0.0)                       # padding_idx = 0

    # PyTorch stores weight_ih as (4H, E); we keep the transposed (E, 4H) layout.
    w_ih = jax.random.uniform(ks[1], (E, 4 * H), jnp.float32, -k_lstm, k_lstm)
    w_hh = jax.random.uniform(ks[2], (H, 4 * H), jnp.float32, -k_lstm, k_lstm)
    b_ih = jax.random.uniform(ks[3], (4 * H,), jnp.float32, -k_lstm, k_lstm)
    b_hh = jax.random.uniform(ks[4], (4 * H,), jnp.float32, -k_lstm, k_lstm)
    b_lstm = (b_ih + b_hh).reshape(1, 4 * H)

    w_fc1 = jax.random.uniform(ks[5], (H, F), jnp.float32, -k_fc1, k_fc1)
    b_fc1 = jnp.zeros((1, F), jnp.float32)
    w_fc2 = jax.random.uniform(ks[6], (F, 1), jnp.float32, -k_fc2, k_fc2)
    b_fc2 = jnp.zeros((1, 1), jnp.float32)

    return dict(embedding=emb, w_ih=w_ih, w_hh=w_hh, b_lstm=b_lstm,
                w_fc1=w_fc1, b_fc1=b_fc1, w_fc2=w_fc2, b_fc2=b_fc2)


if __name__ == "__main__":
    # Small shapes consistent with the module's forward:
    B, T = 8, 8                     # batch, max sequence length
    V, E, H, F = 20, 16, 32, 32     # num_embeddings, embedding_dim, rnn_hidden, fc_hidden

    key = jax.random.PRNGKey(0)
    k_tok, k_len, k_par = jax.random.split(key, 3)

    lengths = jax.random.randint(k_len, (B,), 1, T + 1).astype(jnp.int32)
    tokens = jax.random.randint(k_tok, (B, T), 1, V).astype(jnp.int32)
    # zero-out (pad) positions past each sequence length, as the Dataset would
    pos = jnp.arange(T)[None, :]
    tokens = jnp.where(pos < lengths[:, None], tokens, 0)

    params = init_params(k_par, V, E, H, F)

    out = try_rnn_forward(tokens, lengths, params)
    out = jax.block_until_ready(out)

    ref = jax.block_until_ready(reference_forward(tokens, lengths, params))
    assert out.shape == (B, 1)
    # tanh-identity sigmoid is a few f32 ulps off the exp-based one; well within tol.
    np.testing.assert_allclose(np.asarray(out), np.asarray(ref), rtol=1e-5, atol=1e-5)

    print("KERNEL_OK")
</pallas_src>

<mosaic_0001>
module attributes {stable_mosaic.version = 11 : i64} {
  func.func @lstm_head_kernel(%arg0: memref<64x1xi32, #tpu.memory_space<vmem>>, %arg1: memref<8x1xi32, #tpu.memory_space<vmem>>, %arg2: memref<24x128xf32, #tpu.memory_space<vmem>>, %arg3: memref<32x128xf32, #tpu.memory_space<vmem>>, %arg4: memref<32x32xf32, #tpu.memory_space<vmem>>, %arg5: memref<1x32xf32, #tpu.memory_space<vmem>>, %arg6: memref<1x32xf32, #tpu.memory_space<vmem>>, %arg7: memref<1x1xf32, #tpu.memory_space<vmem>>, %arg8: memref<8x1xf32, #tpu.memory_space<vmem>>) attributes {dimension_semantics = [], scalar_prefetch = 0 : i64, scratch_operands = 0 : i64, tpu.core_type = #tpu.core_type<tc>} {
    %c0 = arith.constant 0 : index
    %c0_0 = arith.constant 0 : index
    %0 = vector.load %arg0[%c0, %c0_0] : memref<64x1xi32, #tpu.memory_space<vmem>>, vector<64x1xi32>
    %c0_1 = arith.constant 0 : index
    %c0_2 = arith.constant 0 : index
    %1 = vector.load %arg1[%c0_1, %c0_2] : memref<8x1xi32, #tpu.memory_space<vmem>>, vector<8x1xi32>
    %c0_3 = arith.constant 0 : index
    %c0_4 = arith.constant 0 : index
    %2 = vector.load %arg3[%c0_3, %c0_4] : memref<32x128xf32, #tpu.memory_space<vmem>>, vector<32x128xf32>
    %c0_5 = arith.constant 0 : index
    %c0_6 = arith.constant 0 : index
    %3 = vector.load %arg2[%c0_5, %c0_6] : memref<24x128xf32, #tpu.memory_space<vmem>>, vector<24x128xf32>
    %4 = tpu.iota {dimensions = array<i32: 1>} : vector<64x24xi32>
    %5 = vector.broadcast %0 : vector<64x1xi32> to vector<64x24xi32>
    %6 = arith.cmpi eq, %4, %5 : vector<64x24xi32>
    %7 = arith.extui %6 : vector<64x24xi1> to vector<64x24xi32>
    %8 = arith.sitofp %7 : vector<64x24xi32> to vector<64x24xf32>
    %cst = arith.constant dense<0.000000e+00> : vector<64x128xf32>
    %9 = tpu.matmul %8, %3, %cst {dimension_numbers = #tpu.dot_dimension_numbers<[1], [0], [0], [1], [0, 0, 1, 1], [], []>} : vector<64x24xf32>, vector<24x128xf32>, vector<64x128xf32> -> vector<64x128xf32>
    %10 = tpu.iota {dimensions = array<i32: 1>} : vector<8x128xi32>
    %c64_i32 = arith.constant 64 : i32
    %11 = vector.broadcast %c64_i32 : i32 to vector<8x128xi32>
    %12 = arith.cmpi sge, %10, %11 : vector<8x128xi32>
    %c96_i32 = arith.constant 96 : i32
    %13 = vector.broadcast %c96_i32 : i32 to vector<8x128xi32>
    %14 = arith.cmpi slt, %10, %13 : vector<8x128xi32>
    %15 = arith.andi %12, %14 : vector<8x128xi1>
    %cst_7 = arith.constant 1.000000e+00 : f32
    %cst_8 = arith.constant 5.000000e-01 : f32
    %16 = vector.broadcast %cst_7 : f32 to vector<8x128xf32>
    %17 = vector.broadcast %cst_8 : f32 to vector<8x128xf32>
    %18 = arith.select %15, %16, %17 : vector<8x128xi1>, vector<8x128xf32>
    %cst_9 = arith.constant 0.000000e+00 : f32
    %cst_10 = arith.constant 5.000000e-01 : f32
    %19 = vector.broadcast %cst_9 : f32 to vector<8x128xf32>
    %20 = vector.broadcast %cst_10 : f32 to vector<8x128xf32>
    %21 = arith.select %15, %19, %20 : vector<8x128xi1>, vector<8x128xf32>
    %c0_i32 = arith.constant 0 : i32
    %22 = vector.broadcast %c0_i32 : i32 to vector<8x1xi32>
    %23 = arith.cmpi sgt, %1, %22 : vector<8x1xi32>
    %c1_i32 = arith.constant 1 : i32
    %24 = vector.broadcast %c1_i32 : i32 to vector<8x1xi32>
    %25 = arith.cmpi sgt, %1, %24 : vector<8x1xi32>
    %c2_i32 = arith.constant 2 : i32
    %26 = vector.broadcast %c2_i32 : i32 to vector<8x1xi32>
    %27 = arith.cmpi sgt, %1, %26 : vector<8x1xi32>
    %c3_i32 = arith.constant 3 : i32
    %28 = vector.broadcast %c3_i32 : i32 to vector<8x1xi32>
    %29 = arith.cmpi sgt, %1, %28 : vector<8x1xi32>
    %c4_i32 = arith.constant 4 : i32
    %30 = vector.broadcast %c4_i32 : i32 to vector<8x1xi32>
    %31 = arith.cmpi sgt, %1, %30 : vector<8x1xi32>
    %c5_i32 = arith.constant 5 : i32
    %32 = vector.broadcast %c5_i32 : i32 to vector<8x1xi32>
    %33 = arith.cmpi sgt, %1, %32 : vector<8x1xi32>
    %c6_i32 = arith.constant 6 : i32
    %34 = vector.broadcast %c6_i32 : i32 to vector<8x1xi32>
    %35 = arith.cmpi sgt, %1, %34 : vector<8x1xi32>
    %c7_i32 = arith.constant 7 : i32
    %36 = vector.broadcast %c7_i32 : i32 to vector<8x1xi32>
    %37 = arith.cmpi sgt, %1, %36 : vector<8x1xi32>
    %cst_11 = arith.constant 0.000000e+00 : f32
    %38 = vector.broadcast %cst_11 : f32 to vector<8x32xf32>
    %cst_12 = arith.constant 0.000000e+00 : f32
    %39 = vector.broadcast %cst_12 : f32 to vector<8x32xf32>
    %40 = vector.extract_strided_slice %9 {offsets = [0, 0], sizes = [8, 128], strides = [1, 1]} : vector<64x128xf32> to vector<8x128xf32>
    %cst_13 = arith.constant dense<0.000000e+00> : vector<8x128xf32>
    %41 = tpu.matmul %38, %2, %cst_13 {dimension_numbers = #tpu.dot_dimension_numbers<[1], [0], [0], [1], [0, 0, 1, 1], [], []>} : vector<8x32xf32>, vector<32x128xf32>, vector<8x128xf32> -> vector<8x128xf32>
    %42 = arith.addf %40, %41 : vector<8x128xf32>
    %43 = math.tanh %42 : vector<8x128xf32>
    %44 = arith.mulf %43, %18 : vector<8x128xf32>
    %45 = arith.addf %44, %21 : vector<8x128xf32>
    %46 = vector.extract_strided_slice %45 {offsets = [0, 0], sizes = [8, 32], strides = [1, 1]} : vector<8x128xf32> to vector<8x32xf32>
    %47 = vector.extract_strided_slice %45 {offsets = [0, 32], sizes = [8, 32], strides = [1, 1]} : vector<8x128xf32> to vector<8x32xf32>
    %48 = vector.extract_strided_slice %45 {offsets = [0, 64], sizes = [8, 32], strides = [1, 1]} : vector<8x128xf32> to vector<8x32xf32>
    %49 = vector.extract_strided_slice %45 {offsets = [0, 96], sizes = [8, 32], strides = [1, 1]} : vector<8x128xf32> to vector<8x32xf32>
    %50 = arith.mulf %47, %39 : vector<8x32xf32>
    %51 = arith.mulf %46, %48 : vector<8x32xf32>
    %52 = arith.addf %50, %51 : vector<8x32xf32>
    %53 = math.tanh %52 : vector<8x32xf32>
    %54 = arith.mulf %49, %53 : vector<8x32xf32>
    %55 = vector.shape_cast %23 : vector<8x1xi1> to vector<8x1xi1>
    %56 = vector.broadcast %55 : vector<8x1xi1> to vector<8x32xi1>
    %57 = arith.select %56, %54, %38 : vector<8x32xi1>, vector<8x32xf32>
    %58 = vector.shape_cast %23 : vector<8x1xi1> to vector<8x1xi1>
    %59 = vector.broadcast %58 : vector<8x1xi1> to vector<8x32xi1>
    %60 = arith.select %59, %52, %39 : vector<8x32xi1>, vector<8x32xf32>
    %61 = vector.extract_strided_slice %9 {offsets = [8, 0], sizes = [8, 128], strides = [1, 1]} : vector<64x128xf32> to vector<8x128xf32>
    %cst_14 = arith.constant dense<0.000000e+00> : vector<8x128xf32>
    %62 = tpu.matmul %57, %2, %cst_14 {dimension_numbers = #tpu.dot_dimension_numbers<[1], [0], [0], [1], [0, 0, 1, 1], [], []>} : vector<8x32xf32>, vector<32x128xf32>, vector<8x128xf32> -> vector<8x128xf32>
    %63 = arith.addf %61, %62 : vector<8x128xf32>
    %64 = math.tanh %63 : vector<8x128xf32>
    %65 = arith.mulf %64, %18 : vector<8x128xf32>
    %66 = arith.addf %65, %21 : vector<8x128xf32>
    %67 = vector.extract_strided_slice %66 {offsets = [0, 0], sizes = [8, 32], strides = [1, 1]} : vector<8x128xf32> to vector<8x32xf32>
    %68 = vector.extract_strided_slice %66 {offsets = [0, 32], sizes = [8, 32], strides = [1, 1]} : vector<8x128xf32> to vector<8x32xf32>
    %69 = vector.extract_strided_slice %66 {offsets = [0, 64], sizes = [8, 32], strides = [1, 1]} : vector<8x128xf32> to vector<8x32xf32>
    %70 = vector.extract_strided_slice %66 {offsets = [0, 96], sizes = [8, 32], strides = [1, 1]} : vector<8x128xf32> to vector<8x32xf32>
    %71 = arith.mulf %68, %60 : vector<8x32xf32>
    %72 = arith.mulf %67, %69 : vector<8x32xf32>
    %73 = arith.addf %71, %72 : vector<8x32xf32>
    %74 = math.tanh %73 : vector<8x32xf32>
    %75 = arith.mulf %70, %74 : vector<8x32xf32>
    %76 = vector.shape_cast %25 : vector<8x1xi1> to vector<8x1xi1>
    %77 = vector.broadcast %76 : vector<8x1xi1> to vector<8x32xi1>
    %78 = arith.select %77, %75, %57 : vector<8x32xi1>, vector<8x32xf32>
    %79 = vector.shape_cast %25 : vector<8x1xi1> to vector<8x1xi1>
    %80 = vector.broadcast %79 : vector<8x1xi1> to vector<8x32xi1>
    %81 = arith.select %80, %73, %60 : vector<8x32xi1>, vector<8x32xf32>
    %82 = vector.extract_strided_slice %9 {offsets = [16, 0], sizes = [8, 128], strides = [1, 1]} : vector<64x128xf32> to vector<8x128xf32>
    %cst_15 = arith.constant dense<0.000000e+00> : vector<8x128xf32>
    %83 = tpu.matmul %78, %2, %cst_15 {dimension_numbers = #tpu.dot_dimension_numbers<[1], [0], [0], [1], [0, 0, 1, 1], [], []>} : vector<8x32xf32>, vector<32x128xf32>, vector<8x128xf32> -> vector<8x128xf32>
    %84 = arith.addf %82, %83 : vector<8x128xf32>
    %85 = math.tanh %84 : vector<8x128xf32>
    %86 = arith.mulf %85, %18 : vector<8x128xf32>
    %87 = arith.addf %86, %21 : vector<8x128xf32>
    %88 = vector.extract_strided_slice %87 {offsets = [0, 0], sizes = [8, 32], strides = [1, 1]} : vector<8x128xf32> to vector<8x32xf32>
    %89 = vector.extract_strided_slice %87 {offsets = [0, 32], sizes = [8, 32], strides = [1, 1]} : vector<8x128xf32> to vector<8x32xf32>
    %90 = vector.extract_strided_slice %87 {offsets = [0, 64], sizes = [8, 32], strides = [1, 1]} : vector<8x128xf32> to vector<8x32xf32>
    %91 = vector.extract_strided_slice %87 {offsets = [0, 96], sizes = [8, 32], strides = [1, 1]} : vector<8x128xf32> to vector<8x32xf32>
    %92 = arith.mulf %89, %81 : vector<8x32xf32>
    %93 = arith.mulf %88, %90 : vector<8x32xf32>
    %94 = arith.addf %92, %93 : vector<8x32xf32>
    %95 = math.tanh %94 : vector<8x32xf32>
    %96 = arith.mulf %91, %95 : vector<8x32xf32>
    %97 = vector.shape_cast %27 : vector<8x1xi1> to vector<8x1xi1>
    %98 = vector.broadcast %97 : vector<8x1xi1> to vector<8x32xi1>
    %99 = arith.select %98, %96, %78 : vector<8x32xi1>, vector<8x32xf32>
    %100 = vector.shape_cast %27 : vector<8x1xi1> to vector<8x1xi1>
    %101 = vector.broadcast %100 : vector<8x1xi1> to vector<8x32xi1>
    %102 = arith.select %101, %94, %81 : vector<8x32xi1>, vector<8x32xf32>
    %103 = vector.extract_strided_slice %9 {offsets = [24, 0], sizes = [8, 128], strides = [1, 1]} : vector<64x128xf32> to vector<8x128xf32>
    %cst_16 = arith.constant dense<0.000000e+00> : vector<8x128xf32>
    %104 = tpu.matmul %99, %2, %cst_16 {dimension_numbers = #tpu.dot_dimension_numbers<[1], [0], [0], [1], [0, 0, 1, 1], [], []>} : vector<8x32xf32>, vector<32x128xf32>, vector<8x128xf32> -> vector<8x128xf32>
    %105 = arith.addf %103, %104 : vector<8x128xf32>
    %106 = math.tanh %105 : vector<8x128xf32>
    %107 = arith.mulf %106, %18 : vector<8x128xf32>
    %108 = arith.addf %107, %21 : vector<8x128xf32>
    %109 = vector.extract_strided_slice %108 {offsets = [0, 0], sizes = [8, 32], strides = [1, 1]} : vector<8x128xf32> to vector<8x32xf32>
    %110 = vector.extract_strided_slice %108 {offsets = [0, 32], sizes = [8, 32], strides = [1, 1]} : vector<8x128xf32> to vector<8x32xf32>
    %111 = vector.extract_strided_slice %108 {offsets = [0, 64], sizes = [8, 32], strides = [1, 1]} : vector<8x128xf32> to vector<8x32xf32>
    %112 = vector.extract_strided_slice %108 {offsets = [0, 96], sizes = [8, 32], strides = [1, 1]} : vector<8x128xf32> to vector<8x32xf32>
    %113 = arith.mulf %110, %102 : vector<8x32xf32>
    %114 = arith.mulf %109, %111 : vector<8x32xf32>
    %115 = arith.addf %113, %114 : vector<8x32xf32>
    %116 = math.tanh %115 : vector<8x32xf32>
    %117 = arith.mulf %112, %116 : vector<8x32xf32>
    %118 = vector.shape_cast %29 : vector<8x1xi1> to vector<8x1xi1>
    %119 = vector.broadcast %118 : vector<8x1xi1> to vector<8x32xi1>
    %120 = arith.select %119, %117, %99 : vector<8x32xi1>, vector<8x32xf32>
    %121 = vector.shape_cast %29 : vector<8x1xi1> to vector<8x1xi1>
    %122 = vector.broadcast %121 : vector<8x1xi1> to vector<8x32xi1>
    %123 = arith.select %122, %115, %102 : vector<8x32xi1>, vector<8x32xf32>
    %124 = vector.extract_strided_slice %9 {offsets = [32, 0], sizes = [8, 128], strides = [1, 1]} : vector<64x128xf32> to vector<8x128xf32>
    %cst_17 = arith.constant dense<0.000000e+00> : vector<8x128xf32>
    %125 = tpu.matmul %120, %2, %cst_17 {dimension_numbers = #tpu.dot_dimension_numbers<[1], [0], [0], [1], [0, 0, 1, 1], [], []>} : vector<8x32xf32>, vector<32x128xf32>, vector<8x128xf32> -> vector<8x128xf32>
    %126 = arith.addf %124, %125 : vector<8x128xf32>
    %127 = math.tanh %126 : vector<8x128xf32>
    %128 = arith.mulf %127, %18 : vector<8x128xf32>
    %129 = arith.addf %128, %21 : vector<8x128xf32>
    %130 = vector.extract_strided_slice %129 {offsets = [0, 0], sizes = [8, 32], strides = [1, 1]} : vector<8x128xf32> to vector<8x32xf32>
    %131 = vector.extract_strided_slice %129 {offsets = [0, 32], sizes = [8, 32], strides = [1, 1]} : vector<8x128xf32> to vector<8x32xf32>
    %132 = vector.extract_strided_slice %129 {offsets = [0, 64], sizes = [8, 32], strides = [1, 1]} : vector<8x128xf32> to vector<8x32xf32>
    %133 = vector.extract_strided_slice %129 {offsets = [0, 96], sizes = [8, 32], strides = [1, 1]} : vector<8x128xf32> to vector<8x32xf32>
    %134 = arith.mulf %131, %123 : vector<8x32xf32>
    %135 = arith.mulf %130, %132 : vector<8x32xf32>
    %136 = arith.addf %134, %135 : vector<8x32xf32>
    %137 = math.tanh %136 : vector<8x32xf32>
    %138 = arith.mulf %133, %137 : vector<8x32xf32>
    %139 = vector.shape_cast %31 : vector<8x1xi1> to vector<8x1xi1>
    %140 = vector.broadcast %139 : vector<8x1xi1> to vector<8x32xi1>
    %141 = arith.select %140, %138, %120 : vector<8x32xi1>, vector<8x32xf32>
    %142 = vector.shape_cast %31 : vector<8x1xi1> to vector<8x1xi1>
    %143 = vector.broadcast %142 : vector<8x1xi1> to vector<8x32xi1>
    %144 = arith.select %143, %136, %123 : vector<8x32xi1>, vector<8x32xf32>
    %145 = vector.extract_strided_slice %9 {offsets = [40, 0], sizes = [8, 128], strides = [1, 1]} : vector<64x128xf32> to vector<8x128xf32>
    %cst_18 = arith.constant dense<0.000000e+00> : vector<8x128xf32>
    %146 = tpu.matmul %141, %2, %cst_18 {dimension_numbers = #tpu.dot_dimension_numbers<[1], [0], [0], [1], [0, 0, 1, 1], [], []>} : vector<8x32xf32>, vector<32x128xf32>, vector<8x128xf32> -> vector<8x128xf32>
    %147 = arith.addf %145, %146 : vector<8x128xf32>
    %148 = math.tanh %147 : vector<8x128xf32>
    %149 = arith.mulf %148, %18 : vector<8x128xf32>
    %150 = arith.addf %149, %21 : vector<8x128xf32>
    %151 = vector.extract_strided_slice %150 {offsets = [0, 0], sizes = [8, 32], strides = [1, 1]} : vector<8x128xf32> to vector<8x32xf32>
    %152 = vector.extract_strided_slice %150 {offsets = [0, 32], sizes = [8, 32], strides = [1, 1]} : vector<8x128xf32> to vector<8x32xf32>
    %153 = vector.extract_strided_slice %150 {offsets = [0, 64], sizes = [8, 32], strides = [1, 1]} : vector<8x128xf32> to vector<8x32xf32>
    %154 = vector.extract_strided_slice %150 {offsets = [0, 96], sizes = [8, 32], strides = [1, 1]} : vector<8x128xf32> to vector<8x32xf32>
    %155 = arith.mulf %152, %144 : vector<8x32xf32>
    %156 = arith.mulf %151, %153 : vector<8x32xf32>
    %157 = arith.addf %155, %156 : vector<8x32xf32>
    %158 = math.tanh %157 : vector<8x32xf32>
    %159 = arith.mulf %154, %158 : vector<8x32xf32>
    %160 = vector.shape_cast %33 : vector<8x1xi1> to vector<8x1xi1>
    %161 = vector.broadcast %160 : vector<8x1xi1> to vector<8x32xi1>
    %162 = arith.select %161, %159, %141 : vector<8x32xi1>, vector<8x32xf32>
    %163 = vector.shape_cast %33 : vector<8x1xi1> to vector<8x1xi1>
    %164 = vector.broadcast %163 : vector<8x1xi1> to vector<8x32xi1>
    %165 = arith.select %164, %157, %144 : vector<8x32xi1>, vector<8x32xf32>
    %166 = vector.extract_strided_slice %9 {offsets = [48, 0], sizes = [8, 128], strides = [1, 1]} : vector<64x128xf32> to vector<8x128xf32>
    %cst_19 = arith.constant dense<0.000000e+00> : vector<8x128xf32>
    %167 = tpu.matmul %162, %2, %cst_19 {dimension_numbers = #tpu.dot_dimension_numbers<[1], [0], [0], [1], [0, 0, 1, 1], [], []>} : vector<8x32xf32>, vector<32x128xf32>, vector<8x128xf32> -> vector<8x128xf32>
    %168 = arith.addf %166, %167 : vector<8x128xf32>
    %169 = math.tanh %168 : vector<8x128xf32>
    %170 = arith.mulf %169, %18 : vector<8x128xf32>
    %171 = arith.addf %170, %21 : vector<8x128xf32>
    %172 = vector.extract_strided_slice %171 {offsets = [0, 0], sizes = [8, 32], strides = [1, 1]} : vector<8x128xf32> to vector<8x32xf32>
    %173 = vector.extract_strided_slice %171 {offsets = [0, 32], sizes = [8, 32], strides = [1, 1]} : vector<8x128xf32> to vector<8x32xf32>
    %174 = vector.extract_strided_slice %171 {offsets = [0, 64], sizes = [8, 32], strides = [1, 1]} : vector<8x128xf32> to vector<8x32xf32>
    %175 = vector.extract_strided_slice %171 {offsets = [0, 96], sizes = [8, 32], strides = [1, 1]} : vector<8x128xf32> to vector<8x32xf32>
    %176 = arith.mulf %173, %165 : vector<8x32xf32>
    %177 = arith.mulf %172, %174 : vector<8x32xf32>
    %178 = arith.addf %176, %177 : vector<8x32xf32>
    %179 = math.tanh %178 : vector<8x32xf32>
    %180 = arith.mulf %175, %179 : vector<8x32xf32>
    %181 = vector.shape_cast %35 : vector<8x1xi1> to vector<8x1xi1>
    %182 = vector.broadcast %181 : vector<8x1xi1> to vector<8x32xi1>
    %183 = arith.select %182, %180, %162 : vector<8x32xi1>, vector<8x32xf32>
    %184 = vector.shape_cast %35 : vector<8x1xi1> to vector<8x1xi1>
    %185 = vector.broadcast %184 : vector<8x1xi1> to vector<8x32xi1>
    %186 = arith.select %185, %178, %165 : vector<8x32xi1>, vector<8x32xf32>
    %187 = vector.extract_strided_slice %9 {offsets = [56, 0], sizes = [8, 128], strides = [1, 1]} : vector<64x128xf32> to vector<8x128xf32>
    %cst_20 = arith.constant dense<0.000000e+00> : vector<8x128xf32>
    %188 = tpu.matmul %183, %2, %cst_20 {dimension_numbers = #tpu.dot_dimension_numbers<[1], [0], [0], [1], [0, 0, 1, 1], [], []>} : vector<8x32xf32>, vector<32x128xf32>, vector<8x128xf32> -> vector<8x128xf32>
    %189 = arith.addf %187, %188 : vector<8x128xf32>
    %190 = math.tanh %189 : vector<8x128xf32>
    %191 = arith.mulf %190, %18 : vector<8x128xf32>
    %192 = arith.addf %191, %21 : vector<8x128xf32>
    %193 = vector.extract_strided_slice %192 {offsets = [0, 0], sizes = [8, 32], strides = [1, 1]} : vector<8x128xf32> to vector<8x32xf32>
    %194 = vector.extract_strided_slice %192 {offsets = [0, 32], sizes = [8, 32], strides = [1, 1]} : vector<8x128xf32> to vector<8x32xf32>
    %195 = vector.extract_strided_slice %192 {offsets = [0, 64], sizes = [8, 32], strides = [1, 1]} : vector<8x128xf32> to vector<8x32xf32>
    %196 = vector.extract_strided_slice %192 {offsets = [0, 96], sizes = [8, 32], strides = [1, 1]} : vector<8x128xf32> to vector<8x32xf32>
    %197 = arith.mulf %194, %186 : vector<8x32xf32>
    %198 = arith.mulf %193, %195 : vector<8x32xf32>
    %199 = arith.addf %197, %198 : vector<8x32xf32>
    %200 = math.tanh %199 : vector<8x32xf32>
    %201 = arith.mulf %196, %200 : vector<8x32xf32>
    %202 = vector.shape_cast %37 : vector<8x1xi1> to vector<8x1xi1>
    %203 = vector.broadcast %202 : vector<8x1xi1> to vector<8x32xi1>
    %204 = arith.select %203, %201, %183 : vector<8x32xi1>, vector<8x32xf32>
    %c0_21 = arith.constant 0 : index
    %c0_22 = arith.constant 0 : index
    %205 = vector.load %arg4[%c0_21, %c0_22] : memref<32x32xf32, #tpu.memory_space<vmem>>, vector<32x32xf32>
    %cst_23 = arith.constant dense<0.000000e+00> : vector<8x32xf32>
    %206 = tpu.matmul %204, %205, %cst_23 {dimension_numbers = #tpu.dot_dimension_numbers<[1], [0], [0], [1], [0, 0, 1, 1], [], []>} : vector<8x32xf32>, vector<32x32xf32>, vector<8x32xf32> -> vector<8x32xf32>
    %c0_24 = arith.constant 0 : index
    %c0_25 = arith.constant 0 : index
    %207 = vector.load %arg5[%c0_24, %c0_25] : memref<1x32xf32, #tpu.memory_space<vmem>>, vector<1x32xf32>
    %208 = vector.broadcast %207 : vector<1x32xf32> to vector<8x32xf32>
    %209 = arith.addf %206, %208 : vector<8x32xf32>
    %cst_26 = arith.constant 0.000000e+00 : f32
    %210 = vector.broadcast %cst_26 : f32 to vector<8x32xf32>
    %211 = arith.maximumf %209, %210 : vector<8x32xf32>
    %c0_27 = arith.constant 0 : index
    %c0_28 = arith.constant 0 : index
    %212 = vector.load %arg6[%c0_27, %c0_28] : memref<1x32xf32, #tpu.memory_space<vmem>>, vector<1x32xf32>
    %213 = vector.broadcast %212 : vector<1x32xf32> to vector<8x32xf32>
    %214 = arith.mulf %211, %213 : vector<8x32xf32>
    %cst_29 = arith.constant dense<0.000000e+00> : vector<8xf32>
    %215 = vector.multi_reduction <add>, %214, %cst_29 [1] : vector<8x32xf32> to vector<8xf32>
    %216 = vector.shape_cast %215 : vector<8xf32> to vector<8x1xf32>
    %c0_30 = arith.constant 0 : index
    %c0_31 = arith.constant 0 : index
    %217 = vector.load %arg7[%c0_30, %c0_31] : memref<1x1xf32, #tpu.memory_space<vmem>>, vector<1x1xf32>
    %218 = vector.broadcast %217 : vector<1x1xf32> to vector<8x1xf32>
    %219 = arith.addf %216, %218 : vector<8x1xf32>
    %220 = arith.negf %219 : vector<8x1xf32>
    %221 = math.exp %220 : vector<8x1xf32>
    %cst_32 = arith.constant 1.000000e+00 : f32
    %222 = vector.broadcast %cst_32 : f32 to vector<8x1xf32>
    %223 = arith.addf %222, %221 : vector<8x1xf32>
    %224 = arith.divf %222, %223 : vector<8x1xf32>
    %c0_33 = arith.constant 0 : index
    %c0_34 = arith.constant 0 : index
    %225 = vector.load %arg8[%c0_33, %c0_34] : memref<8x1xf32, #tpu.memory_space<vmem>>, vector<8x1xf32>
    tpu.vector_store %arg8[%c0_33, %c0_34], %224 {strides = array<i32>} : memref<8x1xf32, #tpu.memory_space<vmem>>, vector<8x1xf32>,
    return
  }
}

</mosaic_0001>

<llo_original>
// kernel: tpu_custom_call.1
$region0: #{tpu_custom_call.1}
  #allocation0 [shape = 'u32[]', space=smem, size = 0x4, offset = 0x4, fixed_abs, tag = 'smem constant byte address 0x4 - core index']
  #allocation1 [shape = 'u32[144,128]{1,0:T(1,128)}', space=vmem, size = 0x12000, scoped, tag = 'internal scratch']
  #allocation2 [shape = 'f32[1,1]{1,0:T(1,128)S(1)}', space=vmem, size = 0x200, scoped, tag = 'scoped memory for tpu_custom_call.1']
  %s0 = inlined_call_operand.vmem [shape: s32[64,1], index: 0, kind: input, shape index: {}]
  %s1 = inlined_call_operand.vmem [shape: s32[8,1], index: 1, kind: input, shape index: {}]
  %s2 = inlined_call_operand.hbm [shape: f32[24,128], index: 2, kind: input, shape index: {}]
  %s3 = inlined_call_operand.vmem [shape: f32[32,128], index: 3, kind: input, shape index: {}]
  %s4 = inlined_call_operand.vmem [shape: f32[32,32], index: 4, kind: input, shape index: {}]
  %s5 = inlined_call_operand.vmem [shape: f32[1,32], index: 5, kind: input, shape index: {}]
  %s6 = inlined_call_operand.vmem [shape: f32[1,32], index: 6, kind: input, shape index: {}]
  %s7 = inlined_call_operand.<no memory space> [shape: f32[1,1], index: 7, kind: input, shape index: {}]
  %s8 = inlined_call_operand.vmem [shape: f32[8,1], index: 8, kind: output, shape index: {}]
  %s9 = sld [smem:[#allocation0]]
  $region46: #{tpu_custom_call.1} parent=0
    _
  %s11 = ssub.s32 1, %s9
  %s12 = scalar_select 0, %s11, %s9
  %v13 = vstv %s7
  %14 = vst [vmem:[#allocation2] sm:$0x1] %v13
  $region1: #{tpu_custom_call.1} parent=0
    #allocation3 [shape = 'u8[12288]{0}', space=vmem, size = 0x3000, scoped, tag = 'input window, operand 2, single buffered']
    #allocation4 [shape = 's32[1]{0}', space=sflag, size = 0x4, scoped, tag = 'scoped memory for tpu_custom_call.1']
    %15 = vsyncpa [#allocation4], 0
    // Predicated region
    $region2: #{tpu_custom_call.1} parent=1 // pred_check
      _
    $region3: #{tpu_custom_call.1} parent=1 // pred_check_branch
      %17 = sbr.rel (0) target = $region5
    $region4: #{tpu_custom_call.1} parent=1 // pred_region
      _
    $region5: #{tpu_custom_call.1} parent=1 // pred_fallthru
      _
    // Predicated region
    $region6: #{tpu_custom_call.1} parent=1 // pred_check
      _
    $region7: #{tpu_custom_call.1} parent=1 // pred_check_branch
      %19 = sbr.rel (0) target = $region9
    $region8: #{tpu_custom_call.1} parent=1 // pred_region
      _
    $region9: #{tpu_custom_call.1} parent=1 // pred_fallthru
      _
    // Predicated region
    $region10: #{tpu_custom_call.1} parent=1 // pred_check
      _
    $region11: #{tpu_custom_call.1} parent=1 // pred_check_branch
      %21 = sbr.rel (0) target = $region13
    $region12: #{tpu_custom_call.1} parent=1 // pred_region
      %s23 = ssub.s32 384, 384
      %24 = vsyncadd [#allocation4], %s23
      %s25 = sshll.u32 [#allocation3], 4
      %s26 = int_to_ptr.vmem [resolvable:$true] %s25
      %31 = dma.hbm_to_vmem [thread:$0]  %s2, 384, %s26, [#allocation4], 128, 128, 8
    $region13: #{tpu_custom_call.1} parent=1 // pred_fallthru
      _
    // Predicated region
    $region14: #{tpu_custom_call.1} parent=1 // pred_check
      _
    $region15: #{tpu_custom_call.1} parent=1 // pred_check_branch
      %33 = sbr.rel (0) target = $region17
    $region16: #{tpu_custom_call.1} parent=1 // pred_region
      _
    $region17: #{tpu_custom_call.1} parent=1 // pred_fallthru
      _
    // Predicated region
    $region18: #{tpu_custom_call.1} parent=1 // pred_check
      _
    $region19: #{tpu_custom_call.1} parent=1 // pred_check_branch
      %35 = sbr.rel (0) target = $region21
    $region20: #{tpu_custom_call.1} parent=1 // pred_region
      _
    $region21: #{tpu_custom_call.1} parent=1 // pred_fallthru
      _
    // Predicated region
    $region22: #{tpu_custom_call.1} parent=1 // pred_check
      _
    $region23: #{tpu_custom_call.1} parent=1 // pred_check_branch
      %37 = sbr.rel (0) target = $region25
    $region24: #{tpu_custom_call.1} parent=1 // pred_region
      _
    $region25: #{tpu_custom_call.1} parent=1 // pred_fallthru
      _
    // Predicated region
    $region26: #{tpu_custom_call.1} parent=1 // pred_check
      _
    $region27: #{tpu_custom_call.1} parent=1 // pred_check_branch
      %39 = sbr.rel (0) target = $region29
    $region28: #{tpu_custom_call.1} parent=1 // pred_region
      _
    $region29: #{tpu_custom_call.1} parent=1 // pred_fallthru
      _
    // Predicated region
    $region30: #{tpu_custom_call.1} parent=1 // pred_check
      _
    $region31: #{tpu_custom_call.1} parent=1 // pred_check_branch
      %41 = sbr.rel (0) target = $region33
    $region32: #{tpu_custom_call.1} parent=1 // pred_region
      _
    $region33: #{tpu_custom_call.1} parent=1 // pred_fallthru
      _
    // Predicated region
    $region34: #{tpu_custom_call.1} parent=1 // pred_check
      _
    $region35: #{tpu_custom_call.1} parent=1 // pred_check_branch
      %43 = sbr.rel (0) target = $region37
    $region36: #{tpu_custom_call.1} parent=1 // pred_region
      %44 = dma.done [#allocation4], 384
    $region37: #{tpu_custom_call.1} parent=1 // pred_fallthru
      _
    %v45 = vld [vmem:[%s0] sm:$0xff]
    %v46 = vld [vmem:[%s0 + $0x8] sm:$0xff]
    %v47 = vld [vmem:[%s0 + $0x10] sm:$0xff]
    %v48 = vld [vmem:[%s0 + $0x18] sm:$0xff]
    %v49 = vld [vmem:[%s0 + $0x20] sm:$0xff]
    %v50 = vld [vmem:[%s0 + $0x28] sm:$0xff]
    %v51 = vld [vmem:[%s0 + $0x30] sm:$0xff]
    %v52 = vld [vmem:[%s0 + $0x38] sm:$0xff]
    %v53 = vld [vmem:[%s1] sm:$0xff]
    %v54 = vld [vmem:[%s3] sm:$0xff]
    %v55 = vld [vmem:[%s3 + $0x8] sm:$0xff]
    %v56 = vld [vmem:[%s3 + $0x10] sm:$0xff]
    %v57 = vld [vmem:[%s3 + $0x18] sm:$0xff]
    %v58 = vld [vmem:[#allocation3] sm:$0xff]
    %v59 = vld [vmem:[#allocation3 + $0x8] sm:$0xff]
    %v60 = vld [vmem:[#allocation3 + $0x10] sm:$0xff]
    %v61 = vlaneseq
    %v62 = vand.u32 %v61, 127
    %63 = vset.pattern.permute.xlu0 0
    %64 = vperm.xlu0 %63, %v45
    %v65 = vpop.permute.xlu0 %64
    %66 = vset.pattern.permute.xlu0 0
    %67 = vperm.xlu0 %66, %v46
    %v68 = vpop.permute.xlu0 %67
    %69 = vset.pattern.permute.xlu0 0
    %70 = vperm.xlu0 %69, %v47
    %v71 = vpop.permute.xlu0 %70
    %72 = vset.pattern.permute.xlu0 0
    %73 = vperm.xlu0 %72, %v48
    %v74 = vpop.permute.xlu0 %73
    %75 = vset.pattern.permute.xlu0 0
    %76 = vperm.xlu0 %75, %v49
    %v77 = vpop.permute.xlu0 %76
    %78 = vset.pattern.permute.xlu0 0
    %79 = vperm.xlu0 %78, %v50
    %v80 = vpop.permute.xlu0 %79
    %81 = vset.pattern.permute.xlu0 0
    %82 = vperm.xlu0 %81, %v51
    %v83 = vpop.permute.xlu0 %82
    %84 = vset.pattern.permute.xlu0 0
    %85 = vperm.xlu0 %84, %v52
    %v86 = vpop.permute.xlu0 %85
    %vm87 = vcmp.eq.s32.totalorder %v62, %v65
    %vm88 = vcmp.eq.s32.totalorder %v62, %v68
    %vm89 = vcmp.eq.s32.totalorder %v62, %v71
    %vm90 = vcmp.eq.s32.totalorder %v62, %v74
    %vm91 = vcmp.eq.s32.totalorder %v62, %v77
    %vm92 = vcmp.eq.s32.totalorder %v62, %v80
    %vm93 = vcmp.eq.s32.totalorder %v62, %v83
    %vm94 = vcmp.eq.s32.totalorder %v62, %v86
    %v95 = vsel %vm87, 1, 0
    %v96 = vsel %vm88, 1, 0
    %v97 = vsel %vm89, 1, 0
    %v98 = vsel %vm90, 1, 0
    %v99 = vsel %vm91, 1, 0
    %v100 = vsel %vm92, 1, 0
    %v101 = vsel %vm93, 1, 0
    %v102 = vsel %vm94, 1, 0
    %v103 = vcvt.s32.f32 %v95
    %v104 = vcvt.s32.f32 %v96
    %v105 = vcvt.s32.f32 %v97
    %v106 = vcvt.s32.f32 %v98
    %v107 = vcvt.s32.f32 %v99
    %v108 = vcvt.s32.f32 %v100
    %v109 = vcvt.s32.f32 %v101
    %v110 = vcvt.s32.f32 %v102
    %vm111 = vcmask 195584
    %v113 = vsel %vm111, %v103, 0
    %v116 = vsel %vm111, %v104, 0
    %v119 = vsel %vm111, %v105, 0
    %v122 = vsel %vm111, %v106, 0
    %v125 = vsel %vm111, %v107, 0
    %v128 = vsel %vm111, %v108, 0
    %v131 = vsel %vm111, %v109, 0
    %v134 = vsel %vm111, %v110, 0
    %136 = vmatprep.subr.mxu0 0.0
    %137 = vmatpush1.msra.mxu0 0.0
    %138 = vmatprep.subr.mxu0 0.0
    %139 = vmatpush1.msra.mxu0 0.0
    %140 = vmatprep.subr.mxu0 0.0
    %141 = vmatpush1.msra.mxu0 0.0
    %142 = vmatprep.subr.mxu0 0.0
    %143 = vmatpush1.msra.mxu0 0.0
    %144 = vmatprep.subr.mxu0 0.0
    %145 = vmatpush1.msra.mxu0 0.0
    %146 = vmatprep.subr.mxu0 0.0
    %147 = vmatpush1.msra.mxu0 0.0
    %148 = vmatprep.subr.mxu0 0.0
    %149 = vmatpush1.msra.mxu0 0.0
    %150 = vmatprep.subr.mxu0 0.0
    %151 = vmatpush1.msra.mxu0 0.0
    %152 = vmatprep.subr.mxu0 0.0
    %153 = vmatpush1.msra.mxu0 0.0
    %154 = vmatprep.subr.mxu0 0.0
    %155 = vmatpush1.msra.mxu0 0.0
    %156 = vmatprep.subr.mxu0 0.0
    %157 = vmatpush1.msra.mxu0 0.0
    %158 = vmatprep.subr.mxu0 0.0
    %159 = vmatpush1.msra.mxu0 0.0
    %160 = vmatprep.subr.mxu0 0.0
    %161 = vmatpush1.msra.mxu0 0.0
    %162 = vmatprep.subr.mxu0 0.0
    %163 = vmatpush1.msra.mxu0 %v60
    %164 = vmatprep.subr.mxu0 0.0
    %165 = vmatpush1.msra.mxu0 %v59
    %166 = vmatprep.subr.mxu0 0.0
    %167 = vmatpush1.msra.mxu0 %v58
    %168 = vmatprep.subr.mxu0 0.0
    %169 = vmatpush2.msra.mxu0 0.0
    %170 = vmatprep.subr.mxu0 0.0
    %171 = vmatpush2.msra.mxu0 0.0
    %172 = vmatprep.subr.mxu0 0.0
    %173 = vmatpush2.msra.mxu0 0.0
    %174 = vmatprep.subr.mxu0 0.0
    %175 = vmatpush2.msra.mxu0 0.0
    %176 = vmatprep.subr.mxu0 0.0
    %177 = vmatpush2.msra.mxu0 0.0
    %178 = vmatprep.subr.mxu0 0.0
    %179 = vmatpush2.msra.mxu0 0.0
    %180 = vmatprep.subr.mxu0 0.0
    %181 = vmatpush2.msra.mxu0 0.0
    %182 = vmatprep.subr.mxu0 0.0
    %183 = vmatpush2.msra.mxu0 0.0
    %184 = vmatprep.subr.mxu0 0.0
    %185 = vmatpush2.msra.mxu0 0.0
    %186 = vmatprep.subr.mxu0 0.0
    %187 = vmatpush2.msra.mxu0 0.0
    %188 = vmatprep.subr.mxu0 0.0
    %189 = vmatpush2.msra.mxu0 0.0
    %190 = vmatprep.subr.mxu0 0.0
    %191 = vmatpush2.msra.mxu0 0.0
    %192 = vmatprep.subr.mxu0 0.0
    %193 = vmatpush2.msra.mxu0 0.0
    %194 = vmatprep.subr.mxu0 0.0
    %195 = vmatpush2.msra.mxu0 0.0
    %196 = vmatprep.subr.mxu0 0.0
    %197 = vmatpush2.msra.mxu0 0.0
    %198 = vmatprep.subr.mxu0 0.0
    %199 = vmatpush2.msra.mxu0 0.0
    %200 = vmatprep.mubr.f32.mxu0 0.0
    %201 = vmatmul.mubr.f32.gmra.mxu0 %v113
    %v202 = vpop.f32.mrf.mxu0
    %v203 = vadd.f32 0.0, %v202
    %v204 = vpop.f32.mrf.mxu0
    %205 = vmatprep.mubr.f32.mxu0 0.0
    %206 = vmatmul.mubr.f32.gmra.mxu0 %v116
    %v207 = vpop.f32.mrf.mxu0
    %v208 = vadd.f32 0.0, %v207
    %v209 = vpop.f32.mrf.mxu0
    %210 = vmatprep.mubr.f32.mxu0 0.0
    %211 = vmatmul.mubr.f32.gmra.mxu0 %v119
    %v212 = vpop.f32.mrf.mxu0
    %v213 = vadd.f32 0.0, %v212
    %v214 = vpop.f32.mrf.mxu0
    %215 = vmatprep.mubr.f32.mxu0 0.0
    %216 = vmatmul.mubr.f32.gmra.mxu0 %v122
    %v217 = vpop.f32.mrf.mxu0
    %v218 = vadd.f32 0.0, %v217
    %v219 = vpop.f32.mrf.mxu0
    %220 = vmatprep.mubr.f32.mxu0 0.0
    %221 = vmatmul.mubr.f32.gmra.mxu0 %v125
    %v222 = vpop.f32.mrf.mxu0
    %v223 = vadd.f32 0.0, %v222
    %v224 = vpop.f32.mrf.mxu0
    %225 = vmatprep.mubr.f32.mxu0 0.0
    %226 = vmatmul.mubr.f32.gmra.mxu0 %v128
    %v227 = vpop.f32.mrf.mxu0
    %v228 = vadd.f32 0.0, %v227
    %v229 = vpop.f32.mrf.mxu0
    %230 = vmatprep.mubr.f32.mxu0 0.0
    %231 = vmatmul.mubr.f32.gmra.mxu0 %v131
    %v232 = vpop.f32.mrf.mxu0
    %v233 = vadd.f32 0.0, %v232
    %v234 = vpop.f32.mrf.mxu0
    %235 = vmatprep.mubr.f32.mxu0 0.0
    %236 = vmatmul.mubr.f32.gmra.mxu0 %v134
    %v237 = vpop.f32.mrf.mxu0
    %v238 = vadd.f32 0.0, %v237
    %v239 = vpop.f32.mrf.mxu0
    %240 = vdwg.mxu0
    %vm241 = vcmp.ge.s32.totalorder %v62, 64
    %vm242 = vcmp.lt.s32.totalorder %v62, 96
    %vm243 = vmand %vm241, %vm242
    %v244 = vsel %vm243, 1.0, 0.5
    %v245 = vsel %vm243, 0.0, 0.5
    %vm246 = vcmp.gt.s32.totalorder %v53, 0
    %vm247 = vcmp.gt.s32.totalorder %v53, 1
    %vm248 = vcmp.gt.s32.totalorder %v53, 2
    %vm249 = vcmp.gt.s32.totalorder %v53, 3
    %vm250 = vcmp.gt.s32.totalorder %v53, 4
    %vm251 = vcmp.gt.s32.totalorder %v53, 5
    %vm252 = vcmp.gt.s32.totalorder %v53, 6
    %vm253 = vcmp.gt.s32.totalorder %v53, 7
    %vm254 = vcmask 261120
    %v256 = vsel %vm254, 0.0, 0
    %258 = vmatprep.subr.mxu0 0.0
    %259 = vmatpush1.msra.mxu0 0.0
    %260 = vmatprep.subr.mxu0 0.0
    %261 = vmatpush1.msra.mxu0 0.0
    %262 = vmatprep.subr.mxu0 0.0
    %263 = vmatpush1.msra.mxu0 0.0
    %264 = vmatprep.subr.mxu0 0.0
    %265 = vmatpush1.msra.mxu0 0.0
    %266 = vmatprep.subr.mxu0 0.0
    %267 = vmatpush1.msra.mxu0 0.0
    %268 = vmatprep.subr.mxu0 0.0
    %269 = vmatpush1.msra.mxu0 0.0
    %270 = vmatprep.subr.mxu0 0.0
    %271 = vmatpush1.msra.mxu0 0.0
    %272 = vmatprep.subr.mxu0 0.0
    %273 = vmatpush1.msra.mxu0 0.0
    %274 = vmatprep.subr.mxu0 0.0
    %275 = vmatpush1.msra.mxu0 0.0
    %276 = vmatprep.subr.mxu0 0.0
    %277 = vmatpush1.msra.mxu0 0.0
    %278 = vmatprep.subr.mxu0 0.0
    %279 = vmatpush1.msra.mxu0 0.0
    %280 = vmatprep.subr.mxu0 0.0
    %281 = vmatpush1.msra.mxu0 0.0
    %282 = vmatprep.subr.mxu0 0.0
    %283 = vmatpush1.msra.mxu0 %v57
    %284 = vmatprep.subr.mxu0 0.0
    %285 = vmatpush1.msra.mxu0 %v56
    %286 = vmatprep.subr.mxu0 0.0
    %287 = vmatpush1.msra.mxu0 %v55
    %288 = vmatprep.subr.mxu0 0.0
    %289 = vmatpush1.msra.mxu0 %v54
    %290 = vmatprep.subr.mxu0 0.0
    %291 = vmatpush2.msra.mxu0 0.0
    %292 = vmatprep.subr.mxu0 0.0
    %293 = vmatpush2.msra.mxu0 0.0
    %294 = vmatprep.subr.mxu0 0.0
    %295 = vmatpush2.msra.mxu0 0.0
    %296 = vmatprep.subr.mxu0 0.0
    %297 = vmatpush2.msra.mxu0 0.0
    %298 = vmatprep.subr.mxu0 0.0
    %299 = vmatpush2.msra.mxu0 0.0
    %300 = vmatprep.subr.mxu0 0.0
    %301 = vmatpush2.msra.mxu0 0.0
    %302 = vmatprep.subr.mxu0 0.0
    %303 = vmatpush2.msra.mxu0 0.0
    %304 = vmatprep.subr.mxu0 0.0
    %305 = vmatpush2.msra.mxu0 0.0
    %306 = vmatprep.subr.mxu0 0.0
    %307 = vmatpush2.msra.mxu0 0.0
    %308 = vmatprep.subr.mxu0 0.0
    %309 = vmatpush2.msra.mxu0 0.0
    %310 = vmatprep.subr.mxu0 0.0
    %311 = vmatpush2.msra.mxu0 0.0
    %312 = vmatprep.subr.mxu0 0.0
    %313 = vmatpush2.msra.mxu0 0.0
    %314 = vmatprep.subr.mxu0 0.0
    %315 = vmatpush2.msra.mxu0 0.0
    %316 = vmatprep.subr.mxu0 0.0
    %317 = vmatpush2.msra.mxu0 0.0
    %318 = vmatprep.subr.mxu0 0.0
    %319 = vmatpush2.msra.mxu0 0.0
    %320 = vmatprep.subr.mxu0 0.0
    %321 = vmatpush2.msra.mxu0 0.0
    %322 = vmatprep.mubr.f32.mxu0 0.0
    %323 = vmatmul.mubr.f32.gmra.mxu0 %v256
    %v324 = vpop.f32.mrf.mxu0
    %v325 = vadd.f32 0.0, %v324
    %v326 = vpop.f32.mrf.mxu0
    %327 = vdwg.mxu0
    %v328 = vadd.f32 %v203, %v325
    %v329 = vtanh.pop %v328
    %v330 = vmul.f32 %v329, %v244
    %v331 = vadd.f32 %v330, %v245
    %v332 = vmul.f32 %v331, 0.0
    %334 = vrot.lane.b32.xlu0 %v331, 64
    %v335 = vpop.permute.xlu0 %334
    %v337 = vmul.f32 %v331, %v335
    %339 = vrot.lane.b32.xlu0 %v337, 32
    %v340 = vpop.permute.xlu0 %339
    %v342 = vadd.f32 %v332, %v340
    %v343 = vtanh.pop %v342
    %345 = vrot.lane.b32.xlu0 %v343, 64
    %v346 = vpop.permute.xlu0 %345
    %v348 = vmul.f32 %v331, %v346
    %v349 = vsel %vm246, 1, 0
    %350 = vset.pattern.permute.xlu0 0
    %351 = vperm.xlu0 %350, %v349
    %v352 = vpop.permute.xlu0 %351
    %vm353 = vcmp.eq.s32.totalorder %v352, 1
    %v354 = vsel %vm353, %v348, 0.0
    %v355 = vsel %vm353, %v342, 0.0
    %357 = vrot.lane.b32.xlu0 %v354, 32
    %v358 = vpop.permute.xlu0 %357
    %v359 = vsel %vm254, %v358, 0
    %361 = vmatprep.subr.mxu0 0.0
    %362 = vmatpush1.msra.mxu0 0.0
    %363 = vmatprep.subr.mxu0 0.0
    %364 = vmatpush1.msra.mxu0 0.0
    %365 = vmatprep.subr.mxu0 0.0
    %366 = vmatpush1.msra.mxu0 0.0
    %367 = vmatprep.subr.mxu0 0.0
    %368 = vmatpush1.msra.mxu0 0.0
    %369 = vmatprep.subr.mxu0 0.0
    %370 = vmatpush1.msra.mxu0 0.0
    %371 = vmatprep.subr.mxu0 0.0
    %372 = vmatpush1.msra.mxu0 0.0
    %373 = vmatprep.subr.mxu0 0.0
    %374 = vmatpush1.msra.mxu0 0.0
    %375 = vmatprep.subr.mxu0 0.0
    %376 = vmatpush1.msra.mxu0 0.0
    %377 = vmatprep.subr.mxu0 0.0
    %378 = vmatpush1.msra.mxu0 0.0
    %379 = vmatprep.subr.mxu0 0.0
    %380 = vmatpush1.msra.mxu0 0.0
    %381 = vmatprep.subr.mxu0 0.0
    %382 = vmatpush1.msra.mxu0 0.0
    %383 = vmatprep.subr.mxu0 0.0
    %384 = vmatpush1.msra.mxu0 0.0
    %385 = vmatprep.subr.mxu0 0.0
    %386 = vmatpush1.msra.mxu0 %v57
    %387 = vmatprep.subr.mxu0 0.0
    %388 = vmatpush1.msra.mxu0 %v56
    %389 = vmatprep.subr.mxu0 0.0
    %390 = vmatpush1.msra.mxu0 %v55
    %391 = vmatprep.subr.mxu0 0.0
    %392 = vmatpush1.msra.mxu0 %v54
    %393 = vmatprep.subr.mxu0 0.0
    %394 = vmatpush2.msra.mxu0 0.0
    %395 = vmatprep.subr.mxu0 0.0
    %396 = vmatpush2.msra.mxu0 0.0
    %397 = vmatprep.subr.mxu0 0.0
    %398 = vmatpush2.msra.mxu0 0.0
    %399 = vmatprep.subr.mxu0 0.0
    %400 = vmatpush2.msra.mxu0 0.0
    %401 = vmatprep.subr.mxu0 0.0
    %402 = vmatpush2.msra.mxu0 0.0
    %403 = vmatprep.subr.mxu0 0.0
    %404 = vmatpush2.msra.mxu0 0.0
    %405 = vmatprep.subr.mxu0 0.0
    %406 = vmatpush2.msra.mxu0 0.0
    %407 = vmatprep.subr.mxu0 0.0
    %408 = vmatpush2.msra.mxu0 0.0
    %409 = vmatprep.subr.mxu0 0.0
    %410 = vmatpush2.msra.mxu0 0.0
    %411 = vmatprep.subr.mxu0 0.0
    %412 = vmatpush2.msra.mxu0 0.0
    %413 = vmatprep.subr.mxu0 0.0
    %414 = vmatpush2.msra.mxu0 0.0
    %415 = vmatprep.subr.mxu0 0.0
    %416 = vmatpush2.msra.mxu0 0.0
    %417 = vmatprep.subr.mxu0 0.0
    %418 = vmatpush2.msra.mxu0 0.0
    %419 = vmatprep.subr.mxu0 0.0
    %420 = vmatpush2.msra.mxu0 0.0
    %421 = vmatprep.subr.mxu0 0.0
    %422 = vmatpush2.msra.mxu0 0.0
    %423 = vmatprep.subr.mxu0 0.0
    %424 = vmatpush2.msra.mxu0 0.0
    %425 = vmatprep.mubr.f32.mxu0 0.0
    %426 = vmatmul.mubr.f32.gmra.mxu0 %v359
    %v427 = vpop.f32.mrf.mxu0
    %v428 = vadd.f32 0.0, %v427
    %v429 = vpop.f32.mrf.mxu0
    %430 = vdwg.mxu0
    %v431 = vadd.f32 %v208, %v428
    %v432 = vtanh.pop %v431
    %v433 = vmul.f32 %v432, %v244
    %v434 = vadd.f32 %v433, %v245
    %v435 = vmul.f32 %v434, %v355
    %437 = vrot.lane.b32.xlu0 %v434, 64
    %v438 = vpop.permute.xlu0 %437
    %v440 = vmul.f32 %v434, %v438
    %442 = vrot.lane.b32.xlu0 %v440, 32
    %v443 = vpop.permute.xlu0 %442
    %v445 = vadd.f32 %v435, %v443
    %v446 = vtanh.pop %v445
    %448 = vrot.lane.b32.xlu0 %v446, 64
    %v449 = vpop.permute.xlu0 %448
    %v451 = vmul.f32 %v434, %v449
    %v452 = vsel %vm247, 1, 0
    %453 = vset.pattern.permute.xlu0 0
    %454 = vperm.xlu0 %453, %v452
    %v455 = vpop.permute.xlu0 %454
    %vm456 = vcmp.eq.s32.totalorder %v455, 1
    %v457 = vsel %vm456, %v451, %v354
    %v458 = vsel %vm456, %v445, %v355
    %460 = vrot.lane.b32.xlu0 %v457, 32
    %v461 = vpop.permute.xlu0 %460
    %v462 = vsel %vm254, %v461, 0
    %464 = vmatprep.subr.mxu0 0.0
    %465 = vmatpush1.msra.mxu0 0.0
    %466 = vmatprep.subr.mxu0 0.0
    %467 = vmatpush1.msra.mxu0 0.0
    %468 = vmatprep.subr.mxu0 0.0
    %469 = vmatpush1.msra.mxu0 0.0
    %470 = vmatprep.subr.mxu0 0.0
    %471 = vmatpush1.msra.mxu0 0.0
    %472 = vmatprep.subr.mxu0 0.0
    %473 = vmatpush1.msra.mxu0 0.0
    %474 = vmatprep.subr.mxu0 0.0
    %475 = vmatpush1.msra.mxu0 0.0
    %476 = vmatprep.subr.mxu0 0.0
    %477 = vmatpush1.msra.mxu0 0.0
    %478 = vmatprep.subr.mxu0 0.0
    %479 = vmatpush1.msra.mxu0 0.0
    %480 = vmatprep.subr.mxu0 0.0
    %481 = vmatpush1.msra.mxu0 0.0
    %482 = vmatprep.subr.mxu0 0.0
    %483 = vmatpush1.msra.mxu0 0.0
    %484 = vmatprep.subr.mxu0 0.0
    %485 = vmatpush1.msra.mxu0 0.0
    %486 = vmatprep.subr.mxu0 0.0
    %487 = vmatpush1.msra.mxu0 0.0
    %488 = vmatprep.subr.mxu0 0.0
    %489 = vmatpush1.msra.mxu0 %v57
    %490 = vmatprep.subr.mxu0 0.0
    %491 = vmatpush1.msra.mxu0 %v56
    %492 = vmatprep.subr.mxu0 0.0
    %493 = vmatpush1.msra.mxu0 %v55
    %494 = vmatprep.subr.mxu0 0.0
    %495 = vmatpush1.msra.mxu0 %v54
    %496 = vmatprep.subr.mxu0 0.0
    %497 = vmatpush2.msra.mxu0 0.0
    %498 = vmatprep.subr.mxu0 0.0
    %499 = vmatpush2.msra.mxu0 0.0
    %500 = vmatprep.subr.mxu0 0.0
    %501 = vmatpush2.msra.mxu0 0.0
    %502 = vmatprep.subr.mxu0 0.0
    %503 = vmatpush2.msra.mxu0 0.0
    %504 = vmatprep.subr.mxu0 0.0
    %505 = vmatpush2.msra.mxu0 0.0
    %506 = vmatprep.subr.mxu0 0.0
    %507 = vmatpush2.msra.mxu0 0.0
    %508 = vmatprep.subr.mxu0 0.0
    %509 = vmatpush2.msra.mxu0 0.0
    %510 = vmatprep.subr.mxu0 0.0
    %511 = vmatpush2.msra.mxu0 0.0
    %512 = vmatprep.subr.mxu0 0.0
    %513 = vmatpush2.msra.mxu0 0.0
    %514 = vmatprep.subr.mxu0 0.0
    %515 = vmatpush2.msra.mxu0 0.0
    %516 = vmatprep.subr.mxu0 0.0
    %517 = vmatpush2.msra.mxu0 0.0
    %518 = vmatprep.subr.mxu0 0.0
    %519 = vmatpush2.msra.mxu0 0.0
    %520 = vmatprep.subr.mxu0 0.0
    %521 = vmatpush2.msra.mxu0 0.0
    %522 = vmatprep.subr.mxu0 0.0
    %523 = vmatpush2.msra.mxu0 0.0
    %524 = vmatprep.subr.mxu0 0.0
    %525 = vmatpush2.msra.mxu0 0.0
    %526 = vmatprep.subr.mxu0 0.0
    %527 = vmatpush2.msra.mxu0 0.0
    %528 = vmatprep.mubr.f32.mxu0 0.0
    %529 = vmatmul.mubr.f32.gmra.mxu0 %v462
    %v530 = vpop.f32.mrf.mxu0
    %v531 = vadd.f32 0.0, %v530
    %v532 = vpop.f32.mrf.mxu0
    %533 = vdwg.mxu0
    %v534 = vadd.f32 %v213, %v531
    %v535 = vtanh.pop %v534
    %v536 = vmul.f32 %v535, %v244
    %v537 = vadd.f32 %v536, %v245
    %v538 = vmul.f32 %v537, %v458
    %540 = vrot.lane.b32.xlu0 %v537, 64
    %v541 = vpop.permute.xlu0 %540
    %v543 = vmul.f32 %v537, %v541
    %545 = vrot.lane.b32.xlu0 %v543, 32
    %v546 = vpop.permute.xlu0 %545
    %v548 = vadd.f32 %v538, %v546
    %v549 = vtanh.pop %v548
    %551 = vrot.lane.b32.xlu0 %v549, 64
    %v552 = vpop.permute.xlu0 %551
    %v554 = vmul.f32 %v537, %v552
    %v555 = vsel %vm248, 1, 0
    %556 = vset.pattern.permute.xlu0 0
    %557 = vperm.xlu0 %556, %v555
    %v558 = vpop.permute.xlu0 %557
    %vm559 = vcmp.eq.s32.totalorder %v558, 1
    %v560 = vsel %vm559, %v554, %v457
    %v561 = vsel %vm559, %v548, %v458
    %563 = vrot.lane.b32.xlu0 %v560, 32
    %v564 = vpop.permute.xlu0 %563
    %v565 = vsel %vm254, %v564, 0
    %567 = vmatprep.subr.mxu0 0.0
    %568 = vmatpush1.msra.mxu0 0.0
    %569 = vmatprep.subr.mxu0 0.0
    %570 = vmatpush1.msra.mxu0 0.0
    %571 = vmatprep.subr.mxu0 0.0
    %572 = vmatpush1.msra.mxu0 0.0
    %573 = vmatprep.subr.mxu0 0.0
    %574 = vmatpush1.msra.mxu0 0.0
    %575 = vmatprep.subr.mxu0 0.0
    %576 = vmatpush1.msra.mxu0 0.0
    %577 = vmatprep.subr.mxu0 0.0
    %578 = vmatpush1.msra.mxu0 0.0
    %579 = vmatprep.subr.mxu0 0.0
    %580 = vmatpush1.msra.mxu0 0.0
    %581 = vmatprep.subr.mxu0 0.0
    %582 = vmatpush1.msra.mxu0 0.0
    %583 = vmatprep.subr.mxu0 0.0
    %584 = vmatpush1.msra.mxu0 0.0
    %585 = vmatprep.subr.mxu0 0.0
    %586 = vmatpush1.msra.mxu0 0.0
    %587 = vmatprep.subr.mxu0 0.0
    %588 = vmatpush1.msra.mxu0 0.0
    %589 = vmatprep.subr.mxu0 0.0
    %590 = vmatpush1.msra.mxu0 0.0
    %591 = vmatprep.subr.mxu0 0.0
    %592 = vmatpush1.msra.mxu0 %v57
    %593 = vmatprep.subr.mxu0 0.0
    %594 = vmatpush1.msra.mxu0 %v56
    %595 = vmatprep.subr.mxu0 0.0
    %596 = vmatpush1.msra.mxu0 %v55
    %597 = vmatprep.subr.mxu0 0.0
    %598 = vmatpush1.msra.mxu0 %v54
    %599 = vmatprep.subr.mxu0 0.0
    %600 = vmatpush2.msra.mxu0 0.0
    %601 = vmatprep.subr.mxu0 0.0
    %602 = vmatpush2.msra.mxu0 0.0
    %603 = vmatprep.subr.mxu0 0.0
    %604 = vmatpush2.msra.mxu0 0.0
    %605 = vmatprep.subr.mxu0 0.0
    %606 = vmatpush2.msra.mxu0 0.0
    %607 = vmatprep.subr.mxu0 0.0
    %608 = vmatpush2.msra.mxu0 0.0
    %609 = vmatprep.subr.mxu0 0.0
    %610 = vmatpush2.msra.mxu0 0.0
    %611 = vmatprep.subr.mxu0 0.0
    %612 = vmatpush2.msra.mxu0 0.0
    %613 = vmatprep.subr.mxu0 0.0
    %614 = vmatpush2.msra.mxu0 0.0
    %615 = vmatprep.subr.mxu0 0.0
    %616 = vmatpush2.msra.mxu0 0.0
    %617 = vmatprep.subr.mxu0 0.0
    %618 = vmatpush2.msra.mxu0 0.0
    %619 = vmatprep.subr.mxu0 0.0
    %620 = vmatpush2.msra.mxu0 0.0
    %621 = vmatprep.subr.mxu0 0.0
    %622 = vmatpush2.msra.mxu0 0.0
    %623 = vmatprep.subr.mxu0 0.0
    %624 = vmatpush2.msra.mxu0 0.0
    %625 = vmatprep.subr.mxu0 0.0
    %626 = vmatpush2.msra.mxu0 0.0
    %627 = vmatprep.subr.mxu0 0.0
    %628 = vmatpush2.msra.mxu0 0.0
    %629 = vmatprep.subr.mxu0 0.0
    %630 = vmatpush2.msra.mxu0 0.0
    %631 = vmatprep.mubr.f32.mxu0 0.0
    %632 = vmatmul.mubr.f32.gmra.mxu0 %v565
    %v633 = vpop.f32.mrf.mxu0
    %v634 = vadd.f32 0.0, %v633
    %v635 = vpop.f32.mrf.mxu0
    %636 = vdwg.mxu0
    %v637 = vadd.f32 %v218, %v634
    %v638 = vtanh.pop %v637
    %v639 = vmul.f32 %v638, %v244
    %v640 = vadd.f32 %v639, %v245
    %v641 = vmul.f32 %v640, %v561
    %643 = vrot.lane.b32.xlu0 %v640, 64
    %v644 = vpop.permute.xlu0 %643
    %v646 = vmul.f32 %v640, %v644
    %648 = vrot.lane.b32.xlu0 %v646, 32
    %v649 = vpop.permute.xlu0 %648
    %v651 = vadd.f32 %v641, %v649
    %v652 = vtanh.pop %v651
    %654 = vrot.lane.b32.xlu0 %v652, 64
    %v655 = vpop.permute.xlu0 %654
    %v657 = vmul.f32 %v640, %v655
    %v658 = vsel %vm249, 1, 0
    %659 = vset.pattern.permute.xlu0 0
    %660 = vperm.xlu0 %659, %v658
    %v661 = vpop.permute.xlu0 %660
    %vm662 = vcmp.eq.s32.totalorder %v661, 1
    %v663 = vsel %vm662, %v657, %v560
    %v664 = vsel %vm662, %v651, %v561
    %666 = vrot.lane.b32.xlu0 %v663, 32
    %v667 = vpop.permute.xlu0 %666
    %v668 = vsel %vm254, %v667, 0
    %670 = vmatprep.subr.mxu0 0.0
    %671 = vmatpush1.msra.mxu0 0.0
    %672 = vmatprep.subr.mxu0 0.0
    %673 = vmatpush1.msra.mxu0 0.0
    %674 = vmatprep.subr.mxu0 0.0
    %675 = vmatpush1.msra.mxu0 0.0
    %676 = vmatprep.subr.mxu0 0.0
    %677 = vmatpush1.msra.mxu0 0.0
    %678 = vmatprep.subr.mxu0 0.0
    %679 = vmatpush1.msra.mxu0 0.0
    %680 = vmatprep.subr.mxu0 0.0
    %681 = vmatpush1.msra.mxu0 0.0
    %682 = vmatprep.subr.mxu0 0.0
    %683 = vmatpush1.msra.mxu0 0.0
    %684 = vmatprep.subr.mxu0 0.0
    %685 = vmatpush1.msra.mxu0 0.0
    %686 = vmatprep.subr.mxu0 0.0
    %687 = vmatpush1.msra.mxu0 0.0
    %688 = vmatprep.subr.mxu0 0.0
    %689 = vmatpush1.msra.mxu0 0.0
    %690 = vmatprep.subr.mxu0 0.0
    %691 = vmatpush1.msra.mxu0 0.0
    %692 = vmatprep.subr.mxu0 0.0
    %693 = vmatpush1.msra.mxu0 0.0
    %694 = vmatprep.subr.mxu0 0.0
    %695 = vmatpush1.msra.mxu0 %v57
    %696 = vmatprep.subr.mxu0 0.0
    %697 = vmatpush1.msra.mxu0 %v56
    %698 = vmatprep.subr.mxu0 0.0
    %699 = vmatpush1.msra.mxu0 %v55
    %700 = vmatprep.subr.mxu0 0.0
    %701 = vmatpush1.msra.mxu0 %v54
    %702 = vmatprep.subr.mxu0 0.0
    %703 = vmatpush2.msra.mxu0 0.0
    %704 = vmatprep.subr.mxu0 0.0
    %705 = vmatpush2.msra.mxu0 0.0
    %706 = vmatprep.subr.mxu0 0.0
    %707 = vmatpush2.msra.mxu0 0.0
    %708 = vmatprep.subr.mxu0 0.0
    %709 = vmatpush2.msra.mxu0 0.0
    %710 = vmatprep.subr.mxu0 0.0
    %711 = vmatpush2.msra.mxu0 0.0
    %712 = vmatprep.subr.mxu0 0.0
    %713 = vmatpush2.msra.mxu0 0.0
    %714 = vmatprep.subr.mxu0 0.0
    %715 = vmatpush2.msra.mxu0 0.0
    %716 = vmatprep.subr.mxu0 0.0
    %717 = vmatpush2.msra.mxu0 0.0
    %718 = vmatprep.subr.mxu0 0.0
    %719 = vmatpush2.msra.mxu0 0.0
    %720 = vmatprep.subr.mxu0 0.0
    %721 = vmatpush2.msra.mxu0 0.0
    %722 = vmatprep.subr.mxu0 0.0
    %723 = vmatpush2.msra.mxu0 0.0
    %724 = vmatprep.subr.mxu0 0.0
    %725 = vmatpush2.msra.mxu0 0.0
    %726 = vmatprep.subr.mxu0 0.0
    %727 = vmatpush2.msra.mxu0 0.0
    %728 = vmatprep.subr.mxu0 0.0
    %729 = vmatpush2.msra.mxu0 0.0
    %730 = vmatprep.subr.mxu0 0.0
    %731 = vmatpush2.msra.mxu0 0.0
    %732 = vmatprep.subr.mxu0 0.0
    %733 = vmatpush2.msra.mxu0 0.0
    %734 = vmatprep.mubr.f32.mxu0 0.0
    %735 = vmatmul.mubr.f32.gmra.mxu0 %v668
    %v736 = vpop.f32.mrf.mxu0
    %v737 = vadd.f32 0.0, %v736
    %v738 = vpop.f32.mrf.mxu0
    %739 = vdwg.mxu0
    %v740 = vadd.f32 %v223, %v737
    %v741 = vtanh.pop %v740
    %v742 = vmul.f32 %v741, %v244
    %v743 = vadd.f32 %v742, %v245
    %v744 = vmul.f32 %v743, %v664
    %746 = vrot.lane.b32.xlu0 %v743, 64
    %v747 = vpop.permute.xlu0 %746
    %v749 = vmul.f32 %v743, %v747
    %751 = vrot.lane.b32.xlu0 %v749, 32
    %v752 = vpop.permute.xlu0 %751
    %v754 = vadd.f32 %v744, %v752
    %v755 = vtanh.pop %v754
    %757 = vrot.lane.b32.xlu0 %v755, 64
    %v758 = vpop.permute.xlu0 %757
    %v760 = vmul.f32 %v743, %v758
    %v761 = vsel %vm250, 1, 0
    %762 = vset.pattern.permute.xlu0 0
    %763 = vperm.xlu0 %762, %v761
    %v764 = vpop.permute.xlu0 %763
    %vm765 = vcmp.eq.s32.totalorder %v764, 1
    %v766 = vsel %vm765, %v760, %v663
    %v767 = vsel %vm765, %v754, %v664
    %769 = vrot.lane.b32.xlu0 %v766, 32
    %v770 = vpop.permute.xlu0 %769
    %v771 = vsel %vm254, %v770, 0
    %773 = vmatprep.subr.mxu0 0.0
    %774 = vmatpush1.msra.mxu0 0.0
    %775 = vmatprep.subr.mxu0 0.0
    %776 = vmatpush1.msra.mxu0 0.0
    %777 = vmatprep.subr.mxu0 0.0
    %778 = vmatpush1.msra.mxu0 0.0
    %779 = vmatprep.subr.mxu0 0.0
    %780 = vmatpush1.msra.mxu0 0.0
    %781 = vmatprep.subr.mxu0 0.0
    %782 = vmatpush1.msra.mxu0 0.0
    %783 = vmatprep.subr.mxu0 0.0
    %784 = vmatpush1.msra.mxu0 0.0
    %785 = vmatprep.subr.mxu0 0.0
    %786 = vmatpush1.msra.mxu0 0.0
    %787 = vmatprep.subr.mxu0 0.0
    %788 = vmatpush1.msra.mxu0 0.0
    %789 = vmatprep.subr.mxu0 0.0
    %790 = vmatpush1.msra.mxu0 0.0
    %791 = vmatprep.subr.mxu0 0.0
    %792 = vmatpush1.msra.mxu0 0.0
    %793 = vmatprep.subr.mxu0 0.0
    %794 = vmatpush1.msra.mxu0 0.0
    %795 = vmatprep.subr.mxu0 0.0
    %796 = vmatpush1.msra.mxu0 0.0
    %797 = vmatprep.subr.mxu0 0.0
    %798 = vmatpush1.msra.mxu0 %v57
    %799 = vmatprep.subr.mxu0 0.0
    %800 = vmatpush1.msra.mxu0 %v56
    %801 = vmatprep.subr.mxu0 0.0
    %802 = vmatpush1.msra.mxu0 %v55
    %803 = vmatprep.subr.mxu0 0.0
    %804 = vmatpush1.msra.mxu0 %v54
    %805 = vmatprep.subr.mxu0 0.0
    %806 = vmatpush2.msra.mxu0 0.0
    %807 = vmatprep.subr.mxu0 0.0
    %808 = vmatpush2.msra.mxu0 0.0
    %809 = vmatprep.subr.mxu0 0.0
    %810 = vmatpush2.msra.mxu0 0.0
    %811 = vmatprep.subr.mxu0 0.0
    %812 = vmatpush2.msra.mxu0 0.0
    %813 = vmatprep.subr.mxu0 0.0
    %814 = vmatpush2.msra.mxu0 0.0
    %815 = vmatprep.subr.mxu0 0.0
    %816 = vmatpush2.msra.mxu0 0.0
    %817 = vmatprep.subr.mxu0 0.0
    %818 = vmatpush2.msra.mxu0 0.0
    %819 = vmatprep.subr.mxu0 0.0
    %820 = vmatpush2.msra.mxu0 0.0
    %821 = vmatprep.subr.mxu0 0.0
    %822 = vmatpush2.msra.mxu0 0.0
    %823 = vmatprep.subr.mxu0 0.0
    %824 = vmatpush2.msra.mxu0 0.0
    %825 = vmatprep.subr.mxu0 0.0
    %826 = vmatpush2.msra.mxu0 0.0
    %827 = vmatprep.subr.mxu0 0.0
    %828 = vmatpush2.msra.mxu0 0.0
    %829 = vmatprep.subr.mxu0 0.0
    %830 = vmatpush2.msra.mxu0 0.0
    %831 = vmatprep.subr.mxu0 0.0
    %832 = vmatpush2.msra.mxu0 0.0
    %833 = vmatprep.subr.mxu0 0.0
    %834 = vmatpush2.msra.mxu0 0.0
    %835 = vmatprep.subr.mxu0 0.0
    %836 = vmatpush2.msra.mxu0 0.0
    %837 = vmatprep.mubr.f32.mxu0 0.0
    %838 = vmatmul.mubr.f32.gmra.mxu0 %v771
    %v839 = vpop.f32.mrf.mxu0
    %v840 = vadd.f32 0.0, %v839
    %v841 = vpop.f32.mrf.mxu0
    %842 = vdwg.mxu0
    %v843 = vadd.f32 %v228, %v840
    %v844 = vtanh.pop %v843
    %v845 = vmul.f32 %v844, %v244
    %v846 = vadd.f32 %v845, %v245
    %v847 = vmul.f32 %v846, %v767
    %849 = vrot.lane.b32.xlu0 %v846, 64
    %v850 = vpop.permute.xlu0 %849
    %v852 = vmul.f32 %v846, %v850
    %854 = vrot.lane.b32.xlu0 %v852, 32
    %v855 = vpop.permute.xlu0 %854
    %v857 = vadd.f32 %v847, %v855
    %v858 = vtanh.pop %v857
    %860 = vrot.lane.b32.xlu0 %v858, 64
    %v861 = vpop.permute.xlu0 %860
    %v863 = vmul.f32 %v846, %v861
    %v864 = vsel %vm251, 1, 0
    %865 = vset.pattern.permute.xlu0 0
    %866 = vperm.xlu0 %865, %v864
    %v867 = vpop.permute.xlu0 %866
    %vm868 = vcmp.eq.s32.totalorder %v867, 1
    %v869 = vsel %vm868, %v863, %v766
    %v870 = vsel %vm868, %v857, %v767
    %872 = vrot.lane.b32.xlu0 %v869, 32
    %v873 = vpop.permute.xlu0 %872
    %v874 = vsel %vm254, %v873, 0
    %876 = vmatprep.subr.mxu0 0.0
    %877 = vmatpush1.msra.mxu0 0.0
    %878 = vmatprep.subr.mxu0 0.0
    %879 = vmatpush1.msra.mxu0 0.0
    %880 = vmatprep.subr.mxu0 0.0
    %881 = vmatpush1.msra.mxu0 0.0
    %882 = vmatprep.subr.mxu0 0.0
    %883 = vmatpush1.msra.mxu0 0.0
    %884 = vmatprep.subr.mxu0 0.0
    %885 = vmatpush1.msra.mxu0 0.0
    %886 = vmatprep.subr.mxu0 0.0
    %887 = vmatpush1.msra.mxu0 0.0
    %888 = vmatprep.subr.mxu0 0.0
    %889 = vmatpush1.msra.mxu0 0.0
    %890 = vmatprep.subr.mxu0 0.0
    %891 = vmatpush1.msra.mxu0 0.0
    %892 = vmatprep.subr.mxu0 0.0
    %893 = vmatpush1.msra.mxu0 0.0
    %894 = vmatprep.subr.mxu0 0.0
    %895 = vmatpush1.msra.mxu0 0.0
    %896 = vmatprep.subr.mxu0 0.0
    %897 = vmatpush1.msra.mxu0 0.0
    %898 = vmatprep.subr.mxu0 0.0
    %899 = vmatpush1.msra.mxu0 0.0
    %900 = vmatprep.subr.mxu0 0.0
    %901 = vmatpush1.msra.mxu0 %v57
    %902 = vmatprep.subr.mxu0 0.0
    %903 = vmatpush1.msra.mxu0 %v56
    %904 = vmatprep.subr.mxu0 0.0
    %905 = vmatpush1.msra.mxu0 %v55
    %906 = vmatprep.subr.mxu0 0.0
    %907 = vmatpush1.msra.mxu0 %v54
    %908 = vmatprep.subr.mxu0 0.0
    %909 = vmatpush2.msra.mxu0 0.0
    %910 = vmatprep.subr.mxu0 0.0
    %911 = vmatpush2.msra.mxu0 0.0
    %912 = vmatprep.subr.mxu0 0.0
    %913 = vmatpush2.msra.mxu0 0.0
    %914 = vmatprep.subr.mxu0 0.0
    %915 = vmatpush2.msra.mxu0 0.0
    %916 = vmatprep.subr.mxu0 0.0
    %917 = vmatpush2.msra.mxu0 0.0
    %918 = vmatprep.subr.mxu0 0.0
    %919 = vmatpush2.msra.mxu0 0.0
    %920 = vmatprep.subr.mxu0 0.0
    %921 = vmatpush2.msra.mxu0 0.0
    %922 = vmatprep.subr.mxu0 0.0
    %923 = vmatpush2.msra.mxu0 0.0
    %924 = vmatprep.subr.mxu0 0.0
    %925 = vmatpush2.msra.mxu0 0.0
    %926 = vmatprep.subr.mxu0 0.0
    %927 = vmatpush2.msra.mxu0 0.0
    %928 = vmatprep.subr.mxu0 0.0
    %929 = vmatpush2.msra.mxu0 0.0
    %930 = vmatprep.subr.mxu0 0.0
    %931 = vmatpush2.msra.mxu0 0.0
    %932 = vmatprep.subr.mxu0 0.0
    %933 = vmatpush2.msra.mxu0 0.0
    %934 = vmatprep.subr.mxu0 0.0
    %935 = vmatpush2.msra.mxu0 0.0
    %936 = vmatprep.subr.mxu0 0.0
    %937 = vmatpush2.msra.mxu0 0.0
    %938 = vmatprep.subr.mxu0 0.0
    %939 = vmatpush2.msra.mxu0 0.0
    %940 = vmatprep.mubr.f32.mxu0 0.0
    %941 = vmatmul.mubr.f32.gmra.mxu0 %v874
    %v942 = vpop.f32.mrf.mxu0
    %v943 = vadd.f32 0.0, %v942
    %v944 = vpop.f32.mrf.mxu0
    %945 = vdwg.mxu0
    %v946 = vadd.f32 %v233, %v943
    %v947 = vtanh.pop %v946
    %v948 = vmul.f32 %v947, %v244
    %v949 = vadd.f32 %v948, %v245
    %v950 = vmul.f32 %v949, %v870
    %952 = vrot.lane.b32.xlu0 %v949, 64
    %v953 = vpop.permute.xlu0 %952
    %v955 = vmul.f32 %v949, %v953
    %957 = vrot.lane.b32.xlu0 %v955, 32
    %v958 = vpop.permute.xlu0 %957
    %v960 = vadd.f32 %v950, %v958
    %v961 = vtanh.pop %v960
    %963 = vrot.lane.b32.xlu0 %v961, 64
    %v964 = vpop.permute.xlu0 %963
    %v966 = vmul.f32 %v949, %v964
    %v967 = vsel %vm252, 1, 0
    %968 = vset.pattern.permute.xlu0 0
    %969 = vperm.xlu0 %968, %v967
    %v970 = vpop.permute.xlu0 %969
    %vm971 = vcmp.eq.s32.totalorder %v970, 1
    %v972 = vsel %vm971, %v966, %v869
    %v973 = vsel %vm971, %v960, %v870
    %975 = vrot.lane.b32.xlu0 %v972, 32
    %v976 = vpop.permute.xlu0 %975
    %v977 = vsel %vm254, %v976, 0
    %979 = vmatprep.subr.mxu0 0.0
    %980 = vmatpush1.msra.mxu0 0.0
    %981 = vmatprep.subr.mxu0 0.0
    %982 = vmatpush1.msra.mxu0 0.0
    %983 = vmatprep.subr.mxu0 0.0
    %984 = vmatpush1.msra.mxu0 0.0
    %985 = vmatprep.subr.mxu0 0.0
    %986 = vmatpush1.msra.mxu0 0.0
    %987 = vmatprep.subr.mxu0 0.0
    %988 = vmatpush1.msra.mxu0 0.0
    %989 = vmatprep.subr.mxu0 0.0
    %990 = vmatpush1.msra.mxu0 0.0
    %991 = vmatprep.subr.mxu0 0.0
    %992 = vmatpush1.msra.mxu0 0.0
    %993 = vmatprep.subr.mxu0 0.0
    %994 = vmatpush1.msra.mxu0 0.0
    %995 = vmatprep.subr.mxu0 0.0
    %996 = vmatpush1.msra.mxu0 0.0
    %997 = vmatprep.subr.mxu0 0.0
    %998 = vmatpush1.msra.mxu0 0.0
    %999 = vmatprep.subr.mxu0 0.0
    %1000 = vmatpush1.msra.mxu0 0.0
    %1001 = vmatprep.subr.mxu0 0.0
    %1002 = vmatpush1.msra.mxu0 0.0
    %1003 = vmatprep.subr.mxu0 0.0
    %1004 = vmatpush1.msra.mxu0 %v57
    %1005 = vmatprep.subr.mxu0 0.0
    %1006 = vmatpush1.msra.mxu0 %v56
    %1007 = vmatprep.subr.mxu0 0.0
    %1008 = vmatpush1.msra.mxu0 %v55
    %1009 = vmatprep.subr.mxu0 0.0
    %1010 = vmatpush1.msra.mxu0 %v54
    %1011 = vmatprep.subr.mxu0 0.0
    %1012 = vmatpush2.msra.mxu0 0.0
    %1013 = vmatprep.subr.mxu0 0.0
    %1014 = vmatpush2.msra.mxu0 0.0
    %1015 = vmatprep.subr.mxu0 0.0
    %1016 = vmatpush2.msra.mxu0 0.0
    %1017 = vmatprep.subr.mxu0 0.0
    %1018 = vmatpush2.msra.mxu0 0.0
    %1019 = vmatprep.subr.mxu0 0.0
    %1020 = vmatpush2.msra.mxu0 0.0
    %1021 = vmatprep.subr.mxu0 0.0
    %1022 = vmatpush2.msra.mxu0 0.0
    %1023 = vmatprep.subr.mxu0 0.0
    %1024 = vmatpush2.msra.mxu0 0.0
    %1025 = vmatprep.subr.mxu0 0.0
    %1026 = vmatpush2.msra.mxu0 0.0
    %1027 = vmatprep.subr.mxu0 0.0
    %1028 = vmatpush2.msra.mxu0 0.0
    %1029 = vmatprep.subr.mxu0 0.0
    %1030 = vmatpush2.msra.mxu0 0.0
    %1031 = vmatprep.subr.mxu0 0.0
    %1032 = vmatpush2.msra.mxu0 0.0
    %1033 = vmatprep.subr.mxu0 0.0
    %1034 = vmatpush2.msra.mxu0 0.0
    %1035 = vmatprep.subr.mxu0 0.0
    %1036 = vmatpush2.msra.mxu0 0.0
    %1037 = vmatprep.subr.mxu0 0.0
    %1038 = vmatpush2.msra.mxu0 0.0
    %1039 = vmatprep.subr.mxu0 0.0
    %1040 = vmatpush2.msra.mxu0 0.0
    %1041 = vmatprep.subr.mxu0 0.0
    %1042 = vmatpush2.msra.mxu0 0.0
    %1043 = vmatprep.mubr.f32.mxu0 0.0
    %1044 = vmatmul.mubr.f32.gmra.mxu0 %v977
    %v1045 = vpop.f32.mrf.mxu0
    %v1046 = vadd.f32 0.0, %v1045
    %v1047 = vpop.f32.mrf.mxu0
    %1048 = vdwg.mxu0
    %v1049 = vadd.f32 %v238, %v1046
    %v1050 = vtanh.pop %v1049
    %v1051 = vmul.f32 %v1050, %v244
    %v1052 = vadd.f32 %v1051, %v245
    %v1053 = vmul.f32 %v1052, %v973
    %1055 = vrot.lane.b32.xlu0 %v1052, 64
    %v1056 = vpop.permute.xlu0 %1055
    %v1058 = vmul.f32 %v1052, %v1056
    %1060 = vrot.lane.b32.xlu0 %v1058, 32
    %v1061 = vpop.permute.xlu0 %1060
    %v1063 = vadd.f32 %v1053, %v1061
    %v1064 = vtanh.pop %v1063
    %1066 = vrot.lane.b32.xlu0 %v1064, 64
    %v1067 = vpop.permute.xlu0 %1066
    %v1069 = vmul.f32 %v1052, %v1067
    %v1070 = vsel %vm253, 1, 0
    %1071 = vset.pattern.permute.xlu0 0
    %1072 = vperm.xlu0 %1071, %v1070
    %v1073 = vpop.permute.xlu0 %1072
    %vm1074 = vcmp.eq.s32.totalorder %v1073, 1
    %v1075 = vsel %vm1074, %v1069, %v972
    %v1076 = vld [vmem:[%s4] sm:$0xff]
    %v1077 = vld [vmem:[%s4 + $0x8] sm:$0xff]
    %v1078 = vld [vmem:[%s4 + $0x10] sm:$0xff]
    %v1079 = vld [vmem:[%s4 + $0x18] sm:$0xff]
    %v1080 = vld [vmem:[%s5] sm:$0x1]
    %v1082 = vlaneseq
    %v1083 = vshrl.u32 %v1082, 7
    %v1084 = vsub.s32 0, %v1083
    %v1085 = vrot.slane %v1080, %v1084
    %1088 = vrot.lane.b32.xlu0 %v1075, 32
    %v1089 = vpop.permute.xlu0 %1088
    %v1090 = vsel %vm254, %v1089, 0
    %1092 = vmatprep.subr.mxu0 0.0
    %1093 = vmatpush1.msra.mxu0 0.0
    %1094 = vmatprep.subr.mxu0 0.0
    %1095 = vmatpush1.msra.mxu0 0.0
    %1096 = vmatprep.subr.mxu0 0.0
    %1097 = vmatpush1.msra.mxu0 0.0
    %1098 = vmatprep.subr.mxu0 0.0
    %1099 = vmatpush1.msra.mxu0 0.0
    %1100 = vmatprep.subr.mxu0 0.0
    %1101 = vmatpush1.msra.mxu0 0.0
    %1102 = vmatprep.subr.mxu0 0.0
    %1103 = vmatpush1.msra.mxu0 0.0
    %1104 = vmatprep.subr.mxu0 0.0
    %1105 = vmatpush1.msra.mxu0 0.0
    %1106 = vmatprep.subr.mxu0 0.0
    %1107 = vmatpush1.msra.mxu0 0.0
    %1108 = vmatprep.subr.mxu0 0.0
    %1109 = vmatpush1.msra.mxu0 0.0
    %1110 = vmatprep.subr.mxu0 0.0
    %1111 = vmatpush1.msra.mxu0 0.0
    %1112 = vmatprep.subr.mxu0 0.0
    %1113 = vmatpush1.msra.mxu0 0.0
    %1114 = vmatprep.subr.mxu0 0.0
    %1115 = vmatpush1.msra.mxu0 0.0
    %1116 = vmatprep.subr.mxu0 0.0
    %1117 = vmatpush1.msra.mxu0 %v1079
    %1118 = vmatprep.subr.mxu0 0.0
    %1119 = vmatpush1.msra.mxu0 %v1078
    %1120 = vmatprep.subr.mxu0 0.0
    %1121 = vmatpush1.msra.mxu0 %v1077
    %1122 = vmatprep.subr.mxu0 0.0
    %1123 = vmatpush1.msra.mxu0 %v1076
    %1124 = vmatprep.subr.mxu0 0.0
    %1125 = vmatpush2.msra.mxu0 0.0
    %1126 = vmatprep.subr.mxu0 0.0
    %1127 = vmatpush2.msra.mxu0 0.0
    %1128 = vmatprep.subr.mxu0 0.0
    %1129 = vmatpush2.msra.mxu0 0.0
    %1130 = vmatprep.subr.mxu0 0.0
    %1131 = vmatpush2.msra.mxu0 0.0
    %1132 = vmatprep.subr.mxu0 0.0
    %1133 = vmatpush2.msra.mxu0 0.0
    %1134 = vmatprep.subr.mxu0 0.0
    %1135 = vmatpush2.msra.mxu0 0.0
    %1136 = vmatprep.subr.mxu0 0.0
    %1137 = vmatpush2.msra.mxu0 0.0
    %1138 = vmatprep.subr.mxu0 0.0
    %1139 = vmatpush2.msra.mxu0 0.0
    %1140 = vmatprep.subr.mxu0 0.0
    %1141 = vmatpush2.msra.mxu0 0.0
    %1142 = vmatprep.subr.mxu0 0.0
    %1143 = vmatpush2.msra.mxu0 0.0
    %1144 = vmatprep.subr.mxu0 0.0
    %1145 = vmatpush2.msra.mxu0 0.0
    %1146 = vmatprep.subr.mxu0 0.0
    %1147 = vmatpush2.msra.mxu0 0.0
    %1148 = vmatprep.subr.mxu0 0.0
    %1149 = vmatpush2.msra.mxu0 0.0
    %1150 = vmatprep.subr.mxu0 0.0
    %1151 = vmatpush2.msra.mxu0 0.0
    %1152 = vmatprep.subr.mxu0 0.0
    %1153 = vmatpush2.msra.mxu0 0.0
    %1154 = vmatprep.subr.mxu0 0.0
    %1155 = vmatpush2.msra.mxu0 0.0
    %1156 = vmatprep.mubr.f32.mxu0 0.0
    %1157 = vmatmul.mubr.f32.gmra.mxu0 %v1090
    %v1158 = vpop.f32.mrf.mxu0
    %v1159 = vadd.f32 %v1085, %v1158
    %v1160 = vpop.f32.mrf.mxu0
    %1161 = vdwg.mxu0
    %v1162 = vmax.f32 %v1159, 0.0
    %v1163 = vld [vmem:[%s6] sm:$0x1]
    %v1165 = vlaneseq
    %v1166 = vshrl.u32 %v1165, 7
    %v1167 = vsub.s32 0, %v1166
    %v1168 = vrot.slane %v1163, %v1167
    %v1170 = vmul.f32 %v1162, %v1168
    %v1171 = vsel %vm254, %v1170, 0.0
    %1172 = vadd.xlane.f32.xlu0 %v1171
    %v1173 = vpop.xlane.xlu0 %1172
    %v1174 = vld [vmem:[#allocation2] sm:$0x1]
    %v1176 = vlaneseq
    %v1177 = vshrl.u32 %v1176, 7
    %v1178 = vsub.s32 0, %v1177
    %v1179 = vrot.slane %v1174, %v1178
    %v1181 = vadd.f32 %v1173, %v1179
    %v1182 = vxor.u32 %v1181, 2147483648
    %v1183 = vmul.f32 %v1182, 1.442695
    %v1184 = vpow.pop %v1183
    %v1185 = vadd.f32 %v1184, 1.0
    %v1186 = vrcp.pop %v1185
    %v1187 = vmul.f32 1.0, %v1186
    %vm1188 = vcmask 7168
    %1189 = vst.msk [vmem:[%s8] sm:$0xff] %vm1188, %v1187
    // Predicated region
    $region38: #{tpu_custom_call.1} parent=1 // pred_check
      _
    $region39: #{tpu_custom_call.1} parent=1 // pred_check_branch
      %1191 = sbr.rel (0) target = $region41
    $region40: #{tpu_custom_call.1} parent=1 // pred_region
      _
    $region41: #{tpu_custom_call.1} parent=1 // pred_fallthru
      _
    // Predicated region
    $region42: #{tpu_custom_call.1} parent=1 // pred_check
      _
    $region43: #{tpu_custom_call.1} parent=1 // pred_check_branch
      %1193 = sbr.rel (0) target = $region45
    $region44: #{tpu_custom_call.1} parent=1 // pred_region
      _
    $region45: #{tpu_custom_call.1} parent=1 // pred_fallthru
      _
    %1194 = vsyncpa [#allocation4], 1

</llo_original>
